<compile_context>
chip_gen: v7x
topology: tpu7x:2x2x1
jax: 0.10.0
libtpu: 0.0.40
codegen_flags: <defaults>
</compile_context>

<pallas_src>
import math

import jax
import jax.numpy as jnp
import numpy as np
from jax import lax
from jax.experimental import pallas as pl
from jax.experimental.pallas import tpu as pltpu

_BIG = 1e12


def _round_up(n, m):
    return ((n + m - 1) // m) * m


def sinusoidal_cos_sin(seq_len, head_size):
    """cos_pos / sin_pos exactly as the PyTorch module builds them."""
    pos = jnp.arange(seq_len, dtype=jnp.float32)[:, None]            # (L, 1)
    idx = jnp.arange(head_size // 2, dtype=jnp.float32)              # (hs/2,)
    theta = jnp.power(10000.0, -2.0 * idx / head_size)               # (hs/2,)
    emb = pos * theta                                                 # (L, hs/2)
    cos_pos = jnp.repeat(jnp.cos(emb), 2, axis=-1)                    # (L, hs)
    sin_pos = jnp.repeat(jnp.sin(emb), 2, axis=-1)                    # (L, hs)
    return cos_pos, sin_pos


def pair_swap_matrix(head_size):
    """R with v @ R == reshape(stack([-v[...,1::2], v[...,::2]], -1), v.shape)."""
    R = np.zeros((head_size, head_size), dtype=np.float32)
    for i in range(head_size // 2):
        R[2 * i + 1, 2 * i] = -1.0
        R[2 * i, 2 * i + 1] = 1.0
    return R


def _single_buffered(block_shape, index_map):
    """Grid-invariant input: request a single VMEM buffer when supported."""
    if hasattr(pl, "Buffered"):
        try:
            return pl.BlockSpec(block_shape, index_map,
                                pipeline_mode=pl.Buffered(1))
        except TypeError:
            pass
    return pl.BlockSpec(block_shape, index_map)


def _make_kernel(hsp, tq, inv_sqrt, compute_dtype):
    """hsp: per-half head size padded to a multiple of 128; tq: query-row tile."""

    def kernel(x_ref, w_ref, b_ref, cos2_ref, sin2_ref, r2_ref,
               amc_ref, padpen_ref, out_ref, qk_ref):
        # x_ref:(1,Lp,H)  w_ref:(1,H,2hsp)  b_ref:(1,1,2hsp)
        # cos2/sin2:(Lp,2hsp)  r2_ref:(2hsp,2hsp)
        # amc_ref:(1,Lp,1)  padpen_ref:(1,1,Lp)
        # out_ref:(1,1,tq,Lp)  qk_ref(scratch):(Lp,2hsp) in compute_dtype
        qt = pl.program_id(2)
        lp = qk_ref.shape[0]

        # ---- projection + fused RoPE, once per (batch, head) ----
        @pl.when(qt == 0)
        def _():
            x = x_ref[0].astype(compute_dtype)                   # (Lp, H)
            w = w_ref[0].astype(compute_dtype)                   # (H, 2hsp)
            qk = jnp.dot(x, w, preferred_element_type=jnp.float32) + b_ref[0]
            # Fused RoPE for [q | k] via one block-diagonal pair-swap matmul.
            qk = (qk * cos2_ref[...]
                  + jnp.dot(qk, r2_ref[...],
                            preferred_element_type=jnp.float32) * sin2_ref[...])
            # Fold 1/sqrt(hs) into q and the key padding mask into k (f32 math,
            # single cast to compute dtype for the scratch).
            qk_ref[:, :hsp] = (qk[:, :hsp] * inv_sqrt).astype(compute_dtype)
            qk_ref[:, hsp:] = (qk[:, hsp:] * amc_ref[0]).astype(compute_dtype)

        # ---- one query-row strip of logits ----
        q0 = pl.multiple_of(qt * tq, tq)
        qw = qk_ref[pl.ds(q0, tq), :hsp]                         # (tq, hsp)
        kw = qk_ref[:, hsp:]                                     # (Lp, hsp)
        logits = lax.dot_general(qw, kw, (((1,), (1,)), ((), ())),
                                 preferred_element_type=jnp.float32)  # (tq, Lp)

        # Epilogue (f32): strict-lower-triangular causal penalty from iotas
        # (VPU filler under the MXU/HBM-bound strip) + key-pad penalty row.
        row = q0 + lax.broadcasted_iota(jnp.int32, (tq, lp), 0)
        col = lax.broadcasted_iota(jnp.int32, (tq, lp), 1)
        causal_pen = jnp.where(row > col,
                               jnp.float32(_BIG * inv_sqrt), jnp.float32(0.0))
        out_ref[0, 0] = (logits - causal_pen - padpen_ref[0]).astype(out_ref.dtype)

    return kernel


def global_pointer_pallas(x, attention_mask, W, b, heads, head_size,
                          out_dtype=jnp.bfloat16, compute_dtype=jnp.bfloat16,
                          tq=None):
    B, L, H = x.shape
    hs = head_size
    out_dim = heads * 2 * hs
    assert W.shape == (H, out_dim) and b.shape == (out_dim,)
    inv_sqrt = 1.0 / math.sqrt(hs)

    # Lane-dense padding: seq -> multiple of 128; each q/k half -> 128 lanes.
    Lp = _round_up(max(L, 8), 128)
    hsp = _round_up(hs, 128)
    pad = Lp - L

    # Query-row tile: largest of 512/256/128 dividing Lp.
    if tq is None:
        tq = max(t for t in (512, 256, 128) if Lp % t == 0)
    nq = Lp // tq

    xp = jnp.pad(x, ((0, 0), (0, pad), (0, 0))) if pad else x
    xp = xp.astype(compute_dtype)
    amp = attention_mask.astype(jnp.float32)
    amp = jnp.pad(amp, ((0, 0), (0, pad))) if pad else amp            # (B, Lp)

    # Per-head weight / bias slabs, q/k halves zero-padded to hsp lanes each.
    W4 = W.reshape(H, heads, 2, hs).transpose(1, 0, 2, 3)             # (heads,H,2,hs)
    W4 = jnp.pad(W4, ((0, 0), (0, 0), (0, 0), (0, hsp - hs)))
    W3 = W4.reshape(heads, H, 2 * hsp).astype(compute_dtype)          # (heads,H,2hsp)
    b4 = jnp.pad(b.reshape(heads, 2, hs).astype(jnp.float32),
                 ((0, 0), (0, 0), (0, hsp - hs)))
    b3 = b4.reshape(heads, 1, 2 * hsp)                                # (heads,1,2hsp)

    # RoPE tables tiled across the fused [q|k] slab (f32).
    cos, sin = sinusoidal_cos_sin(Lp, hs)
    cosp = jnp.pad(cos, ((0, 0), (0, hsp - hs)))
    sinp = jnp.pad(sin, ((0, 0), (0, hsp - hs)))
    cos2 = jnp.concatenate([cosp, cosp], axis=-1)                     # (Lp, 2hsp)
    sin2 = jnp.concatenate([sinp, sinp], axis=-1)                     # (Lp, 2hsp)
    R = pair_swap_matrix(hs)
    Rp = np.zeros((hsp, hsp), np.float32)
    Rp[:hs, :hs] = R
    R2 = np.zeros((2 * hsp, 2 * hsp), np.float32)
    R2[:hsp, :hsp] = Rp
    R2[hsp:, hsp:] = Rp
    R2 = jnp.asarray(R2)

    # Mask operands / key-pad penalty (already scaled by 1/sqrt(hs)).
    am_col = amp[..., None]                                           # (B, Lp, 1)
    pad_pen = ((1.0 - amp) * (_BIG * inv_sqrt))[:, None, :]           # (B, 1, Lp)

    # Explicit scoped-VMEM budget from the per-step footprint (+ headroom).
    cb = jnp.dtype(compute_dtype).itemsize
    ob = jnp.dtype(out_dtype).itemsize
    est = (2 * Lp * H * cb                      # x block (double buffered)
           + 2 * H * 2 * hsp * cb               # per-head W slab
           + 2 * 8 * 2 * hsp * 4                # bias (padded)
           + 2 * Lp * 2 * hsp * 4               # cos2 + sin2 (single-buffered)
           + (2 * hsp) * (2 * hsp) * 4          # R2
           + 2 * Lp * 128 * 4                   # mask column (lane-padded)
           + 2 * 8 * Lp * 4                     # pad-penalty row
           + 2 * tq * Lp * ob                   # output strip (double buffered)
           + Lp * 2 * hsp * cb)                 # qk scratch
    vmem_limit = int(min(max(int(est * 1.5) + (4 << 20), 32 << 20), 100 << 20))

    kernel = _make_kernel(hsp, tq, inv_sqrt, compute_dtype)

    out = pl.pallas_call(
        kernel,
        out_shape=jax.ShapeDtypeStruct((B, heads, Lp, Lp), out_dtype),
        grid=(B, heads, nq),
        in_specs=[
            pl.BlockSpec((1, Lp, H), lambda bb, h, q: (bb, 0, 0)),          # x
            pl.BlockSpec((1, H, 2 * hsp), lambda bb, h, q: (h, 0, 0)),      # W slab
            pl.BlockSpec((1, 1, 2 * hsp), lambda bb, h, q: (h, 0, 0)),      # bias
            _single_buffered((Lp, 2 * hsp), lambda bb, h, q: (0, 0)),       # cos2
            _single_buffered((Lp, 2 * hsp), lambda bb, h, q: (0, 0)),       # sin2
            _single_buffered((2 * hsp, 2 * hsp), lambda bb, h, q: (0, 0)),  # R2
            pl.BlockSpec((1, Lp, 1), lambda bb, h, q: (bb, 0, 0)),          # key mask col
            pl.BlockSpec((1, 1, Lp), lambda bb, h, q: (bb, 0, 0)),          # pad penalty row
        ],
        out_specs=pl.BlockSpec((1, 1, tq, Lp), lambda bb, h, q: (bb, h, q, 0)),
        scratch_shapes=[pltpu.VMEM((Lp, 2 * hsp), compute_dtype)],
        compiler_params=pltpu.CompilerParams(
            dimension_semantics=("parallel", "parallel", "arbitrary"),
            vmem_limit_bytes=vmem_limit),
    )(xp, W3, b3, cos2, sin2, R2, am_col, pad_pen)

    return out[:, :, :L, :L]


def global_pointer_reference(x, attention_mask, W, b, heads, head_size):
    """Pure-JAX mirror of the PyTorch forward (for correctness check)."""
    B, L, H = x.shape
    hs = head_size
    out = x @ W + b                                   # (B, L, heads*2*hs)
    out = out.reshape(B, L, heads, 2 * hs)
    qw, kw = out[..., :hs], out[..., hs:]
    cos_pos, sin_pos = sinusoidal_cos_sin(L, hs)
    cos_pos = cos_pos[None, :, None, :]
    sin_pos = sin_pos[None, :, None, :]

    def rot(v):
        v2 = jnp.stack([-v[..., 1::2], v[..., ::2]], axis=-1).reshape(v.shape)
        return v * cos_pos + v2 * sin_pos

    qw, kw = rot(qw), rot(kw)
    logits = jnp.einsum('bmhd,bnhd->bhmn', qw, kw)
    pad = attention_mask.astype(jnp.float32)[:, None, None, :]
    logits = logits * pad - (1.0 - pad) * _BIG
    tril = jnp.tril(jnp.ones((L, L), jnp.float32), -1)
    logits = logits - tril * _BIG
    return logits / hs ** 0.5


if __name__ == "__main__":
    # Small shapes consistent with GlobalPointer.forward: (batch, seq, hidden)
    B, L, H = 2, 8, 32
    heads, head_size = 4, 16

    key = jax.random.PRNGKey(0)
    kx, kw, kb = jax.random.split(key, 3)
    x = jax.random.normal(kx, (B, L, H), dtype=jnp.float32)
    bound = 1.0 / math.sqrt(H)
    W = jax.random.uniform(kw, (H, heads * head_size * 2),
                           minval=-bound, maxval=bound, dtype=jnp.float32)
    b = jax.random.uniform(kb, (heads * head_size * 2,),
                           minval=-bound, maxval=bound, dtype=jnp.float32)
    # padding mask: first sequence full length, second sequence length 5
    attention_mask = jnp.array(
        [[1] * 8, [1] * 5 + [0] * 3], dtype=jnp.float32)

    ref = global_pointer_reference(x, attention_mask, W, b, heads, head_size)

    # 1) f32 compute + f32 output: exact-semantics check vs the reference.
    out_f32 = global_pointer_pallas(x, attention_mask, W, b, heads, head_size,
                                    out_dtype=jnp.float32,
                                    compute_dtype=jnp.float32)
    out_f32 = jax.block_until_ready(out_f32)
    assert out_f32.shape == (B, heads, L, L)
    np.testing.assert_allclose(np.asarray(out_f32), np.asarray(ref),
                               rtol=1e-4, atol=1e-2)

    # 2) default (bf16 MXU inputs + bf16 logits writeback): compare unmasked
    #    entries only (the -1e12 penalties round in bf16, which is harmless).
    out_bf16 = jax.block_until_ready(
        global_pointer_pallas(x, attention_mask, W, b, heads, head_size))
    assert out_bf16.shape == (B, heads, L, L)
    assert out_bf16.dtype == jnp.bfloat16
    ref_np = np.asarray(ref)
    valid = ref_np > -1e9
    np.testing.assert_allclose(
        np.asarray(out_bf16.astype(jnp.float32))[valid], ref_np[valid],
        rtol=1e-1, atol=1e-1)

    print("KERNEL_OK")
</pallas_src>

<mosaic_0001>
module attributes {stable_mosaic.version = 11 : i64} {
  func.func @kernel(%arg0: i32, %arg1: i32, %arg2: i32, %arg3: memref<1x128x32xf32, #tpu.memory_space<vmem>>, %arg4: memref<1x32x256xf32, #tpu.memory_space<vmem>>, %arg5: memref<1x1x256xf32, #tpu.memory_space<vmem>>, %arg6: memref<128x256xf32, #tpu.memory_space<vmem>>, %arg7: memref<128x256xf32, #tpu.memory_space<vmem>>, %arg8: memref<256x256xf32, #tpu.memory_space<vmem>>, %arg9: memref<1x128x1xf32, #tpu.memory_space<vmem>>, %arg10: memref<1x1x128xf32, #tpu.memory_space<vmem>>, %arg11: memref<1x1x128x128xf32, #tpu.memory_space<vmem>>, %arg12: memref<128x256xf32, #tpu.memory_space<vmem>>) attributes {dimension_semantics = [#tpu.dimension_semantics<parallel>, #tpu.dimension_semantics<parallel>, #tpu.dimension_semantics<arbitrary>], iteration_bounds = array<i64: 2, 4, 1>, scalar_prefetch = 0 : i64, scratch_operands = 1 : i64, tpu.core_type = #tpu.core_type<tc>, window_params = [{transform_indices = @transform_0, window_bounds = array<i64: 1, 128, 32>}, {transform_indices = @transform_1, window_bounds = array<i64: 1, 32, 256>}, {transform_indices = @transform_2, window_bounds = array<i64: 1, 1, 256>}, {pipeline_mode = #tpu.pipeline_mode<synchronous>, transform_indices = @transform_3, window_bounds = array<i64: 128, 256>}, {pipeline_mode = #tpu.pipeline_mode<synchronous>, transform_indices = @transform_4, window_bounds = array<i64: 128, 256>}, {pipeline_mode = #tpu.pipeline_mode<synchronous>, transform_indices = @transform_5, window_bounds = array<i64: 256, 256>}, {transform_indices = @transform_6, window_bounds = array<i64: 1, 128, 1>}, {transform_indices = @transform_7, window_bounds = array<i64: 1, 1, 128>}, {transform_indices = @transform_8, window_bounds = array<i64: 1, 1, 128, 128>}]} {
    %c0_i32 = arith.constant 0 : i32
    %0 = arith.cmpi eq, %arg2, %c0_i32 : i32
    %1 = arith.extui %0 : i1 to i32
    %c0_i32_0 = arith.constant 0 : i32
    %2 = arith.cmpi ne, %1, %c0_i32_0 : i32
    scf.if %2 {
      %c0_11 = arith.constant 0 : index
      %c0_12 = arith.constant 0 : index
      %c0_13 = arith.constant 0 : index
      %25 = vector.load %arg3[%c0_11, %c0_12, %c0_13] : memref<1x128x32xf32, #tpu.memory_space<vmem>>, vector<1x128x32xf32>
      %26 = vector.shape_cast %25 : vector<1x128x32xf32> to vector<128x32xf32>
      %c0_14 = arith.constant 0 : index
      %c0_15 = arith.constant 0 : index
      %c0_16 = arith.constant 0 : index
      %27 = vector.load %arg4[%c0_14, %c0_15, %c0_16] : memref<1x32x256xf32, #tpu.memory_space<vmem>>, vector<1x32x256xf32>
      %28 = vector.shape_cast %27 : vector<1x32x256xf32> to vector<32x256xf32>
      %cst_17 = arith.constant dense<0.000000e+00> : vector<128x256xf32>
      %29 = tpu.matmul %26, %28, %cst_17 {dimension_numbers = #tpu.dot_dimension_numbers<[1], [0], [0], [1], [0, 0, 1, 1], [], []>} : vector<128x32xf32>, vector<32x256xf32>, vector<128x256xf32> -> vector<128x256xf32>
      %c0_18 = arith.constant 0 : index
      %c0_19 = arith.constant 0 : index
      %c0_20 = arith.constant 0 : index
      %30 = vector.load %arg5[%c0_18, %c0_19, %c0_20] : memref<1x1x256xf32, #tpu.memory_space<vmem>>, vector<1x1x256xf32>
      %31 = vector.shape_cast %30 : vector<1x1x256xf32> to vector<1x256xf32>
      %32 = vector.broadcast %31 : vector<1x256xf32> to vector<128x256xf32>
      %33 = arith.addf %29, %32 : vector<128x256xf32>
      %c0_21 = arith.constant 0 : index
      %c0_22 = arith.constant 0 : index
      %34 = vector.load %arg6[%c0_21, %c0_22] : memref<128x256xf32, #tpu.memory_space<vmem>>, vector<128x256xf32>
      %35 = arith.mulf %33, %34 : vector<128x256xf32>
      %c0_23 = arith.constant 0 : index
      %c0_24 = arith.constant 0 : index
      %36 = vector.load %arg8[%c0_23, %c0_24] : memref<256x256xf32, #tpu.memory_space<vmem>>, vector<256x256xf32>
      %cst_25 = arith.constant dense<0.000000e+00> : vector<128x256xf32>
      %37 = tpu.matmul %33, %36, %cst_25 {dimension_numbers = #tpu.dot_dimension_numbers<[1], [0], [0], [1], [0, 0, 1, 1], [], []>} : vector<128x256xf32>, vector<256x256xf32>, vector<128x256xf32> -> vector<128x256xf32>
      %c0_26 = arith.constant 0 : index
      %c0_27 = arith.constant 0 : index
      %38 = vector.load %arg7[%c0_26, %c0_27] : memref<128x256xf32, #tpu.memory_space<vmem>>, vector<128x256xf32>
      %39 = arith.mulf %37, %38 : vector<128x256xf32>
      %40 = arith.addf %35, %39 : vector<128x256xf32>
      %41 = vector.extract_strided_slice %40 {offsets = [0, 0], sizes = [128, 128], strides = [1, 1]} : vector<128x256xf32> to vector<128x128xf32>
      %cst_28 = arith.constant 2.500000e-01 : f32
      %42 = vector.broadcast %cst_28 : f32 to vector<128x128xf32>
      %43 = arith.mulf %41, %42 : vector<128x128xf32>
      %c0_29 = arith.constant 0 : index
      %c0_30 = arith.constant 0 : index
      %44 = vector.load %arg12[%c0_29, %c0_30] : memref<128x256xf32, #tpu.memory_space<vmem>>, vector<128x128xf32>
      tpu.vector_store %arg12[%c0_29, %c0_30], %43 {strides = array<i32>} : memref<128x256xf32, #tpu.memory_space<vmem>>, vector<128x128xf32>,
      %45 = vector.extract_strided_slice %40 {offsets = [0, 128], sizes = [128, 128], strides = [1, 1]} : vector<128x256xf32> to vector<128x128xf32>
      %c0_31 = arith.constant 0 : index
      %c0_32 = arith.constant 0 : index
      %c0_33 = arith.constant 0 : index
      %46 = vector.load %arg9[%c0_31, %c0_32, %c0_33] : memref<1x128x1xf32, #tpu.memory_space<vmem>>, vector<1x128x1xf32>
      %47 = vector.shape_cast %46 : vector<1x128x1xf32> to vector<128x1xf32>
      %48 = vector.broadcast %47 : vector<128x1xf32> to vector<128x128xf32>
      %49 = arith.mulf %45, %48 : vector<128x128xf32>
      %c0_34 = arith.constant 0 : index
      %c128_35 = arith.constant 128 : index
      %50 = vector.load %arg12[%c0_34, %c128_35] : memref<128x256xf32, #tpu.memory_space<vmem>>, vector<128x128xf32>
      tpu.vector_store %arg12[%c0_34, %c128_35], %49 {strides = array<i32>} : memref<128x256xf32, #tpu.memory_space<vmem>>, vector<128x128xf32>,
    } else {
    }
    %c128_i32 = arith.constant 128 : i32
    %3 = arith.muli %arg2, %c128_i32 : i32
    %4 = tpu.assume_multiple %3, 128 : i32
    %5 = arith.index_cast %4 : i32 to index
    %c0 = arith.constant 0 : index
    %6 = vector.load %arg12[%5, %c0] : memref<128x256xf32, #tpu.memory_space<vmem>>, vector<128x128xf32>
    %c0_1 = arith.constant 0 : index
    %c128 = arith.constant 128 : index
    %7 = vector.load %arg12[%c0_1, %c128] : memref<128x256xf32, #tpu.memory_space<vmem>>, vector<128x128xf32>
    %cst = arith.constant dense<0.000000e+00> : vector<128x128xf32>
    %8 = tpu.matmul %6, %7, %cst {dimension_numbers = #tpu.dot_dimension_numbers<[1], [1], [0], [0], [0, 0, 1, 0], [], []>} : vector<128x128xf32>, vector<128x128xf32>, vector<128x128xf32> -> vector<128x128xf32>
    %9 = tpu.iota {dimensions = array<i32: 0>} : vector<128x128xi32>
    %10 = vector.broadcast %4 : i32 to vector<128x128xi32>
    %11 = arith.addi %10, %9 : vector<128x128xi32>
    %12 = tpu.iota {dimensions = array<i32: 1>} : vector<128x128xi32>
    %13 = arith.cmpi sgt, %11, %12 : vector<128x128xi32>
    %cst_2 = arith.constant 2.500000e+11 : f32
    %cst_3 = arith.constant 0.000000e+00 : f32
    %14 = vector.broadcast %cst_2 : f32 to vector<128x128xf32>
    %15 = vector.broadcast %cst_3 : f32 to vector<128x128xf32>
    %16 = arith.select %13, %14, %15 : vector<128x128xi1>, vector<128x128xf32>
    %17 = arith.subf %8, %16 : vector<128x128xf32>
    %c0_4 = arith.constant 0 : index
    %c0_5 = arith.constant 0 : index
    %c0_6 = arith.constant 0 : index
    %18 = vector.load %arg10[%c0_4, %c0_5, %c0_6] : memref<1x1x128xf32, #tpu.memory_space<vmem>>, vector<1x1x128xf32>
    %19 = vector.shape_cast %18 : vector<1x1x128xf32> to vector<1x128xf32>
    %20 = vector.broadcast %19 : vector<1x128xf32> to vector<128x128xf32>
    %21 = arith.subf %17, %20 : vector<128x128xf32>
    %c0_7 = arith.constant 0 : index
    %c0_8 = arith.constant 0 : index
    %c0_9 = arith.constant 0 : index
    %c0_10 = arith.constant 0 : index
    %22 = vector.load %arg11[%c0_7, %c0_8, %c0_9, %c0_10] : memref<1x1x128x128xf32, #tpu.memory_space<vmem>>, vector<1x1x128x128xf32>
    %23 = vector.shape_cast %22 : vector<1x1x128x128xf32> to vector<128x128xf32>
    %24 = vector.shape_cast %21 : vector<128x128xf32> to vector<1x1x128x128xf32>
    tpu.vector_store %arg11[%c0_7, %c0_8, %c0_9, %c0_10], %24 {strides = array<i32>} : memref<1x1x128x128xf32, #tpu.memory_space<vmem>>, vector<1x1x128x128xf32>,
    return
  }
  func.func @transform_0(%arg0: i32, %arg1: i32, %arg2: i32) -> (i32, i32, i32) {
    %c0_i32 = arith.constant 0 : i32
    %c0_i32_0 = arith.constant 0 : i32
    %c0_i32_1 = arith.constant 0 : i32
    return %arg0, %c0_i32, %c0_i32_0 : i32, i32, i32
  }
  func.func @transform_1(%arg0: i32, %arg1: i32, %arg2: i32) -> (i32, i32, i32) {
    %c0_i32 = arith.constant 0 : i32
    %c0_i32_0 = arith.constant 0 : i32
    %c0_i32_1 = arith.constant 0 : i32
    return %arg1, %c0_i32, %c0_i32_0 : i32, i32, i32
  }
  func.func @transform_2(%arg0: i32, %arg1: i32, %arg2: i32) -> (i32, i32, i32) {
    %c0_i32 = arith.constant 0 : i32
    %c0_i32_0 = arith.constant 0 : i32
    %c0_i32_1 = arith.constant 0 : i32
    return %arg1, %c0_i32, %c0_i32_0 : i32, i32, i32
  }
  func.func @transform_3(%arg0: i32, %arg1: i32, %arg2: i32) -> (i32, i32) {
    %c0_i32 = arith.constant 0 : i32
    %c0_i32_0 = arith.constant 0 : i32
    %c0_i32_1 = arith.constant 0 : i32
    return %c0_i32, %c0_i32_0 : i32, i32
  }
  func.func @transform_4(%arg0: i32, %arg1: i32, %arg2: i32) -> (i32, i32) {
    %c0_i32 = arith.constant 0 : i32
    %c0_i32_0 = arith.constant 0 : i32
    %c0_i32_1 = arith.constant 0 : i32
    return %c0_i32, %c0_i32_0 : i32, i32
  }
  func.func @transform_5(%arg0: i32, %arg1: i32, %arg2: i32) -> (i32, i32) {
    %c0_i32 = arith.constant 0 : i32
    %c0_i32_0 = arith.constant 0 : i32
    %c0_i32_1 = arith.constant 0 : i32
    return %c0_i32, %c0_i32_0 : i32, i32
  }
  func.func @transform_6(%arg0: i32, %arg1: i32, %arg2: i32) -> (i32, i32, i32) {
    %c0_i32 = arith.constant 0 : i32
    %c0_i32_0 = arith.constant 0 : i32
    %c0_i32_1 = arith.constant 0 : i32
    return %arg0, %c0_i32, %c0_i32_0 : i32, i32, i32
  }
  func.func @transform_7(%arg0: i32, %arg1: i32, %arg2: i32) -> (i32, i32, i32) {
    %c0_i32 = arith.constant 0 : i32
    %c0_i32_0 = arith.constant 0 : i32
    %c0_i32_1 = arith.constant 0 : i32
    return %arg0, %c0_i32, %c0_i32_0 : i32, i32, i32
  }
  func.func @transform_8(%arg0: i32, %arg1: i32, %arg2: i32) -> (i32, i32, i32, i32) {
    %c0_i32 = arith.constant 0 : i32
    %c0_i32_0 = arith.constant 0 : i32
    return %arg0, %arg1, %arg2, %c0_i32 : i32, i32, i32, i32
  }
}

</mosaic_0001>

<llo_original>
// kernel: tpu_custom_call.1
$region0: #{tpu_custom_call.1}
  #allocation0 [shape = 'u32[]', space=smem, size = 0x4, offset = 0x4, fixed_abs, tag = 'smem constant byte address 0x4 - core index']
  #allocation1 [shape = 'u32[144,128]{1,0:T(1,128)}', space=vmem, size = 0x12000, scoped, tag = 'internal scratch']
  #allocation2 [shape = 'f32[128,256]{1,0:T(8,128)}', space=vmem, size = 0x20000, scoped, tag = 'scratch operand']
  %s0 = inlined_call_operand.vmem [shape: f32[2,128,32], index: 0, kind: input, shape index: {}]
  %s1 = inlined_call_operand.hbm [shape: f32[4,32,256], index: 1, kind: input, shape index: {}]
  %s2 = inlined_call_operand.vmem [shape: f32[4,1,256], index: 2, kind: input, shape index: {}]
  %s3 = inlined_call_operand.hbm [shape: f32[128,256], index: 3, kind: input, shape index: {}]
  %s4 = inlined_call_operand.hbm [shape: f32[128,256], index: 4, kind: input, shape index: {}]
  %s5 = inlined_call_operand.vmem [shape: f32[256,256], index: 5, kind: input, shape index: {}]
  %s6 = inlined_call_operand.vmem [shape: f32[2,128,1], index: 6, kind: input, shape index: {}]
  %s7 = inlined_call_operand.vmem [shape: f32[2,1,128], index: 7, kind: input, shape index: {}]
  %s8 = inlined_call_operand.hbm [shape: f32[2,4,128,128], index: 8, kind: output, shape index: {}]
  %s9 = sld [smem:[#allocation0]]
  $region81: #{tpu_custom_call.1} parent=0
    _
  %s11 = ssub.s32 1, %s9
  %s12 = scalar_select 0, %s11, %s9
  $region1: #{tpu_custom_call.1} parent=0
    #allocation3 [shape = 'u8[65536]{0}', space=vmem, size = 0x10000, scoped, tag = 'input window, operand 1']
    #allocation4 [shape = 's32[2]{0}', space=sflag, size = 0x8, scoped, tag = 'scoped memory for tpu_custom_call.1']
    #allocation5 [shape = 's32[2]{0}', space=sflag, size = 0x8, scoped, tag = 'scoped memory for tpu_custom_call.1']
    #allocation6 [shape = 'u8[131072]{0}', space=vmem, size = 0x20000, scoped, tag = 'input window, operand 3, single buffered']
    #allocation7 [shape = 's32[1]{0}', space=sflag, size = 0x4, scoped, tag = 'scoped memory for tpu_custom_call.1']
    #allocation8 [shape = 'u8[131072]{0}', space=vmem, size = 0x20000, scoped, tag = 'input window, operand 4, single buffered']
    #allocation9 [shape = 'u8[131072]{0}', space=vmem, size = 0x20000, scoped, tag = 'output window, operand 0']
    %13 = vsyncpa [#allocation4], 0
    %s14 = scalar_lea.sflag [#allocation4], 1
    %15 = vsyncpa %s14, 0
    %16 = vsyncpa [#allocation7], 0
    %17 = vsyncpa [#allocation5], 0
    %s18 = scalar_lea.sflag [#allocation5], 1
    %19 = vsyncpa %s18, 0
    loop: start=0, step=1, limit=10
    $region2: #{tpu_custom_call.1} parent=1 // loop_pre_header
      _
    $region3: #{tpu_custom_call.1} parent=1 // loop_header
      %s21 = sphi 0, %s25
      %p22 = scmp.ge.s32.totalorder %s21, 10
      %s28 = sphi 0, %s47
      %s29 = sphi 0, %s43
      %s30 = sphi 0, %s39
      %s31 = sphi 0, %s28
      %s32 = sphi 0, %s29
      %s33 = sphi 0, %s30
      %s34 = sphi 0, %s31
      %s35 = sphi 0, %s32
      %s36 = sphi 0, %s33
      %s50 = sphi 0, %s52
      %s53 = sphi 0, %s50
      %s54 = sphi 0, %s53
      %s70 = sphi 0, %s54
      %s76 = sphi 0, %s78
      %s79 = sphi 0, %s76
      %s80 = sphi 0, %s79
      %s96 = sphi 0, %s80
      %s102 = sphi 0, %s104
      %s105 = sphi 0, %s102
      %s106 = sphi 0, %s105
      %s122 = sphi 0, %s106
      %s126 = sphi 0, %s126
      %s128 = sphi 0, %s126
      %s129 = sphi 0, %s128
      %s143 = sphi 0, %s129
      %s147 = sphi 0, %s147
      %s149 = sphi 0, %s147
      %s150 = sphi 0, %s149
      %s164 = sphi 0, %s150
      %s168 = sphi 0, %s168
      %s170 = sphi 0, %s168
      %s171 = sphi 0, %s170
      %s185 = sphi 0, %s171
      %s191 = sphi 0, %s193
      %s194 = sphi 0, %s191
      %s195 = sphi 0, %s194
      %s211 = sphi 0, %s195
      %s217 = sphi 0, %s219
      %s220 = sphi 0, %s217
      %s221 = sphi 0, %s220
      %s237 = sphi 0, %s221
      %s247 = sphi 0, %s249
      %s250 = sphi 0, %s247
      %s251 = sphi 0, %s250
      %s267 = sphi 0, %s251
    $region4: #{tpu_custom_call.1} parent=1 // loop_header_branch
      %24 = sbr.rel (%p22) target = $region8
    $region5: #{tpu_custom_call.1} parent=1 // loop_body
      %s26 = ssub.s32 %s21, 1
      %s27 = ssub.s32 %s21, 2
      %s37 = sadd.s32 1, %s30
      %p38 = scmp.ge.s32.totalorder %s37, 1
      %s39 = scalar_select %p38, 0, %s37
      %s40 = sadd.s32 1, %s29
      %s41 = scalar_select %p38, %s40, %s29
      %p42 = scmp.ge.s32.totalorder %s41, 4
      %s43 = scalar_select %p42, 0, %s41
      %s44 = sadd.s32 1, %s28
      %s45 = scalar_select %p42, %s44, %s28
      %p46 = scmp.ge.s32.totalorder %s45, 2
      %s47 = scalar_select %p46, 0, %s45
      %s48 = ssub.s32 %s28, %s47
      %p49 = scmp.eq.s32.totalorder %s48, 0
      %s51 = sadd.s32 %s50, 1
      %s52 = scalar_select %p49, %s50, %s51
      %p55 = pneg %p49
      %p56 = scmp.eq.s32.totalorder %s21, 7
      %p57 = por %p55, %p56
      %p58 = scmp.ne.s32.totalorder %s50, %s53
      %p59 = scmp.eq.s32.totalorder %s21, 0
      %p60 = por %p58, %p59
      %p61 = scmp.ne.s32.totalorder %s50, %s53
      %p62 = scmp.eq.s32.totalorder %s26, 7
      %p63 = por %p61, %p62
      %p64 = scmp.ne.s32.totalorder %s53, %s54
      %p65 = scmp.eq.s32.totalorder %s26, 0
      %p66 = por %p64, %p65
      %p67 = scmp.ne.s32.totalorder %s53, %s54
      %p68 = scmp.eq.s32.totalorder %s27, 7
      %p69 = por %p67, %p68
      %p71 = scmp.ne.s32.totalorder %s54, %s70
      %p72 = scmp.eq.s32.totalorder %s27, 0
      %p73 = por %p71, %p72
      %s74 = ssub.s32 %s29, %s43
      %p75 = scmp.eq.s32.totalorder %s74, 0
      %s77 = sadd.s32 %s76, 1
      %s78 = scalar_select %p75, %s76, %s77
      %p81 = pneg %p75
      %p82 = scmp.eq.s32.totalorder %s21, 7
      %p83 = por %p81, %p82
      %p84 = scmp.ne.s32.totalorder %s76, %s79
      %p85 = scmp.eq.s32.totalorder %s21, 0
      %p86 = por %p84, %p85
      %p87 = scmp.ne.s32.totalorder %s76, %s79
      %p88 = scmp.eq.s32.totalorder %s26, 7
      %p89 = por %p87, %p88
      %p90 = scmp.ne.s32.totalorder %s79, %s80
      %p91 = scmp.eq.s32.totalorder %s26, 0
      %p92 = por %p90, %p91
      %p93 = scmp.ne.s32.totalorder %s79, %s80
      %p94 = scmp.eq.s32.totalorder %s27, 7
      %p95 = por %p93, %p94
      %p97 = scmp.ne.s32.totalorder %s80, %s96
      %p98 = scmp.eq.s32.totalorder %s27, 0
      %p99 = por %p97, %p98
      %s100 = ssub.s32 %s29, %s43
      %p101 = scmp.eq.s32.totalorder %s100, 0
      %s103 = sadd.s32 %s102, 1
      %s104 = scalar_select %p101, %s102, %s103
      %p107 = pneg %p101
      %p108 = scmp.eq.s32.totalorder %s21, 7
      %p109 = por %p107, %p108
      %p110 = scmp.ne.s32.totalorder %s102, %s105
      %p111 = scmp.eq.s32.totalorder %s21, 0
      %p112 = por %p110, %p111
      %p113 = scmp.ne.s32.totalorder %s102, %s105
      %p114 = scmp.eq.s32.totalorder %s26, 7
      %p115 = por %p113, %p114
      %p116 = scmp.ne.s32.totalorder %s105, %s106
      %p117 = scmp.eq.s32.totalorder %s26, 0
      %p118 = por %p116, %p117
      %p119 = scmp.ne.s32.totalorder %s105, %s106
      %p120 = scmp.eq.s32.totalorder %s27, 7
      %p121 = por %p119, %p120
      %p123 = scmp.ne.s32.totalorder %s106, %s122
      %p124 = scmp.eq.s32.totalorder %s27, 0
      %p125 = por %p123, %p124
      %s127 = sadd.s32 %s126, 1
      %p130 = scmp.eq.s32.totalorder %s21, 7
      %p131 = scmp.ne.s32.totalorder %s126, %s128
      %p132 = scmp.eq.s32.totalorder %s21, 0
      %p133 = por %p131, %p132
      %p134 = scmp.ne.s32.totalorder %s126, %s128
      %p135 = scmp.eq.s32.totalorder %s26, 7
      %p136 = por %p134, %p135
      %p137 = scmp.ne.s32.totalorder %s128, %s129
      %p138 = scmp.eq.s32.totalorder %s26, 0
      %p139 = por %p137, %p138
      %p140 = scmp.ne.s32.totalorder %s128, %s129
      %p141 = scmp.eq.s32.totalorder %s27, 7
      %p142 = por %p140, %p141
      %p144 = scmp.ne.s32.totalorder %s129, %s143
      %p145 = scmp.eq.s32.totalorder %s27, 0
      %p146 = por %p144, %p145
      %s148 = sadd.s32 %s147, 1
      %p151 = scmp.eq.s32.totalorder %s21, 7
      %p152 = scmp.ne.s32.totalorder %s147, %s149
      %p153 = scmp.eq.s32.totalorder %s21, 0
      %p154 = por %p152, %p153
      %p155 = scmp.ne.s32.totalorder %s147, %s149
      %p156 = scmp.eq.s32.totalorder %s26, 7
      %p157 = por %p155, %p156
      %p158 = scmp.ne.s32.totalorder %s149, %s150
      %p159 = scmp.eq.s32.totalorder %s26, 0
      %p160 = por %p158, %p159
      %p161 = scmp.ne.s32.totalorder %s149, %s150
      %p162 = scmp.eq.s32.totalorder %s27, 7
      %p163 = por %p161, %p162
      %p165 = scmp.ne.s32.totalorder %s150, %s164
      %p166 = scmp.eq.s32.totalorder %s27, 0
      %p167 = por %p165, %p166
      %s169 = sadd.s32 %s168, 1
      %p172 = scmp.eq.s32.totalorder %s21, 7
      %p173 = scmp.ne.s32.totalorder %s168, %s170
      %p174 = scmp.eq.s32.totalorder %s21, 0
      %p175 = por %p173, %p174
      %p176 = scmp.ne.s32.totalorder %s168, %s170
      %p177 = scmp.eq.s32.totalorder %s26, 7
      %p178 = por %p176, %p177
      %p179 = scmp.ne.s32.totalorder %s170, %s171
      %p180 = scmp.eq.s32.totalorder %s26, 0
      %p181 = por %p179, %p180
      %p182 = scmp.ne.s32.totalorder %s170, %s171
      %p183 = scmp.eq.s32.totalorder %s27, 7
      %p184 = por %p182, %p183
      %p186 = scmp.ne.s32.totalorder %s171, %s185
      %p187 = scmp.eq.s32.totalorder %s27, 0
      %p188 = por %p186, %p187
      %s189 = ssub.s32 %s28, %s47
      %p190 = scmp.eq.s32.totalorder %s189, 0
      %s192 = sadd.s32 %s191, 1
      %s193 = scalar_select %p190, %s191, %s192
      %p196 = pneg %p190
      %p197 = scmp.eq.s32.totalorder %s21, 7
      %p198 = por %p196, %p197
      %p199 = scmp.ne.s32.totalorder %s191, %s194
      %p200 = scmp.eq.s32.totalorder %s21, 0
      %p201 = por %p199, %p200
      %p202 = scmp.ne.s32.totalorder %s191, %s194
      %p203 = scmp.eq.s32.totalorder %s26, 7
      %p204 = por %p202, %p203
      %p205 = scmp.ne.s32.totalorder %s194, %s195
      %p206 = scmp.eq.s32.totalorder %s26, 0
      %p207 = por %p205, %p206
      %p208 = scmp.ne.s32.totalorder %s194, %s195
      %p209 = scmp.eq.s32.totalorder %s27, 7
      %p210 = por %p208, %p209
      %p212 = scmp.ne.s32.totalorder %s195, %s211
      %p213 = scmp.eq.s32.totalorder %s27, 0
      %p214 = por %p212, %p213
      %s215 = ssub.s32 %s28, %s47
      %p216 = scmp.eq.s32.totalorder %s215, 0
      %s218 = sadd.s32 %s217, 1
      %s219 = scalar_select %p216, %s217, %s218
      %p222 = pneg %p216
      %p223 = scmp.eq.s32.totalorder %s21, 7
      %p224 = por %p222, %p223
      %p225 = scmp.ne.s32.totalorder %s217, %s220
      %p226 = scmp.eq.s32.totalorder %s21, 0
      %p227 = por %p225, %p226
      %p228 = scmp.ne.s32.totalorder %s217, %s220
      %p229 = scmp.eq.s32.totalorder %s26, 7
      %p230 = por %p228, %p229
      %p231 = scmp.ne.s32.totalorder %s220, %s221
      %p232 = scmp.eq.s32.totalorder %s26, 0
      %p233 = por %p231, %p232
      %p234 = scmp.ne.s32.totalorder %s220, %s221
      %p235 = scmp.eq.s32.totalorder %s27, 7
      %p236 = por %p234, %p235
      %p238 = scmp.ne.s32.totalorder %s221, %s237
      %p239 = scmp.eq.s32.totalorder %s27, 0
      %p240 = por %p238, %p239
      %s241 = ssub.s32 %s28, %s47
      %s242 = ssub.s32 %s29, %s43
      %s243 = sor.u32 %s241, %s242
      %s244 = ssub.s32 %s30, %s39
      %s245 = sor.u32 %s243, %s244
      %p246 = scmp.eq.s32.totalorder %s245, 0
      %s248 = sadd.s32 %s247, 1
      %s249 = scalar_select %p246, %s247, %s248
      %p252 = pneg %p246
      %p253 = scmp.eq.s32.totalorder %s21, 7
      %p254 = por %p252, %p253
      %p255 = scmp.ne.s32.totalorder %s247, %s250
      %p256 = scmp.eq.s32.totalorder %s21, 0
      %p257 = por %p255, %p256
      %p258 = scmp.ne.s32.totalorder %s247, %s250
      %p259 = scmp.eq.s32.totalorder %s26, 7
      %p260 = por %p258, %p259
      %p261 = scmp.ne.s32.totalorder %s250, %s251
      %p262 = scmp.eq.s32.totalorder %s26, 0
      %p263 = por %p261, %p262
      %p264 = scmp.ne.s32.totalorder %s250, %s251
      %p265 = scmp.eq.s32.totalorder %s27, 7
      %p266 = por %p264, %p265
      %p268 = scmp.ne.s32.totalorder %s251, %s267
      %p269 = scmp.eq.s32.totalorder %s27, 0
      %p270 = por %p268, %p269
      %p271 = scmp.le.s32.totalorder 1, %s21
      %p272 = scmp.lt.s32.totalorder %s21, 9
      %p273 = pnand %p271, %p272
      %p274 = pneg %p273
      // Predicated region
      $region9: #{tpu_custom_call.1} parent=5 // pred_check
        _
      $region10: #{tpu_custom_call.1} parent=5 // pred_check_branch
        %276 = sbr.rel (%p273) target = $region12
      $region11: #{tpu_custom_call.1} parent=5 // pred_region
        %s277 = ssub.s32 %s21, 1
        // Predicated region
        $region13: #{tpu_custom_call.1} parent=11 // pred_check
          %p278 = pneg %p139
        $region14: #{tpu_custom_call.1} parent=11 // pred_check_branch
          %280 = sbr.rel (%p278) target = $region16
        $region15: #{tpu_custom_call.1} parent=11 // pred_region
          %s282 = ssub.s32 4096, 4096
          %283 = vsyncadd [#allocation7], %s282
          %s284 = sshll.u32 [#allocation6], 4
          %s285 = int_to_ptr.vmem [resolvable:$true] %s284
          %290 = dma.hbm_to_vmem [thread:$0]  %s3, 4096, %s285, [#allocation7], 256, 256, 16
        $region16: #{tpu_custom_call.1} parent=11 // pred_fallthru
          _
        // Predicated region
        $region17: #{tpu_custom_call.1} parent=11 // pred_check
          %p291 = pneg %p160
        $region18: #{tpu_custom_call.1} parent=11 // pred_check_branch
          %293 = sbr.rel (%p291) target = $region20
        $region19: #{tpu_custom_call.1} parent=11 // pred_region
          %s295 = ssub.s32 4096, 4096
          %296 = vsyncadd [#allocation7], %s295
          %s297 = sshll.u32 [#allocation8], 4
          %s298 = int_to_ptr.vmem [resolvable:$true] %s297
          %303 = dma.hbm_to_vmem [thread:$0]  %s4, 4096, %s298, [#allocation7], 256, 256, 16
        $region20: #{tpu_custom_call.1} parent=11 // pred_fallthru
          _
        // Predicated region
        $region21: #{tpu_custom_call.1} parent=11 // pred_check
          %p304 = pneg %p181
        $region22: #{tpu_custom_call.1} parent=11 // pred_check_branch
          %306 = sbr.rel (%p304) target = $region24
        $region23: #{tpu_custom_call.1} parent=11 // pred_region
          _
        $region24: #{tpu_custom_call.1} parent=11 // pred_fallthru
          _
      $region12: #{tpu_custom_call.1} parent=5 // pred_fallthru
        _
      %p307 = scmp.lt.s32.totalorder %s21, 8
      // Predicated region
      $region25: #{tpu_custom_call.1} parent=5 // pred_check
        %p308 = pneg %p307
      $region26: #{tpu_custom_call.1} parent=5 // pred_check_branch
        %310 = sbr.rel (%p308) target = $region28
      $region27: #{tpu_custom_call.1} parent=5 // pred_region
        // Predicated region
        $region29: #{tpu_custom_call.1} parent=27 // pred_check
          %p311 = pneg %p60
        $region30: #{tpu_custom_call.1} parent=27 // pred_check_branch
          %313 = sbr.rel (%p311) target = $region32
        $region31: #{tpu_custom_call.1} parent=27 // pred_region
          %p314 = scmp.lt.s32.totalorder %s28, 1
          %s315 = scalar_select %p314, %s28, 1
          %s316 = smul.addr %s315, 16
          %s317 = smul.addr %s316, 8
          %s318 = scalar_lea.vmem %s0, %s317
        $region32: #{tpu_custom_call.1} parent=27 // pred_fallthru
          _
        // Predicated region
        $region33: #{tpu_custom_call.1} parent=27 // pred_check
          %p319 = pneg %p86
        $region34: #{tpu_custom_call.1} parent=27 // pred_check_branch
          %321 = sbr.rel (%p319) target = $region36
        $region35: #{tpu_custom_call.1} parent=27 // pred_region
          %s322 = sand.u32 %s76, 1
          %s323 = scalar_lea.sflag [#allocation4], %s322
          %s324 = sand.u32 %s76, 1
          %s325 = smul.addr %s324, 64
          %s326 = scalar_lea.vmem [#allocation3], %s325
          %s328 = ssub.s32 1024, 1024
          %329 = vsyncadd %s323, %s328
          %s330 = smul.addr %s29, 8
          %s331 = smul.addr %s330, 128
          %s332 = scalar_lea.hbm %s1, %s331
          %s333 = sshll.u32 %s326, 4
          %s334 = int_to_ptr.vmem [resolvable:$true] %s333
          %339 = dma.hbm_to_vmem [thread:$0]  %s332, 1024, %s334, %s323, 256, 256, 16
        $region36: #{tpu_custom_call.1} parent=27 // pred_fallthru
          _
        // Predicated region
        $region37: #{tpu_custom_call.1} parent=27 // pred_check
          %p340 = pneg %p112
        $region38: #{tpu_custom_call.1} parent=27 // pred_check_branch
          %342 = sbr.rel (%p340) target = $region40
        $region39: #{tpu_custom_call.1} parent=27 // pred_region
          %p343 = scmp.lt.s32.totalorder %s29, 3
          %s344 = scalar_select %p343, %s29, 3
          %s345 = smul.addr %s344, 2
          %s346 = scalar_lea.vmem %s2, %s345
        $region40: #{tpu_custom_call.1} parent=27 // pred_fallthru
          _
        // Predicated region
        $region41: #{tpu_custom_call.1} parent=27 // pred_check
          %p347 = pneg %p201
        $region42: #{tpu_custom_call.1} parent=27 // pred_check_branch
          %349 = sbr.rel (%p347) target = $region44
        $region43: #{tpu_custom_call.1} parent=27 // pred_region
          %p350 = scmp.lt.s32.totalorder %s28, 1
          %s351 = scalar_select %p350, %s28, 1
          %s352 = smul.addr %s351, 16
          %s353 = smul.addr %s352, 8
          %s354 = scalar_lea.vmem %s6, %s353
        $region44: #{tpu_custom_call.1} parent=27 // pred_fallthru
          _
        // Predicated region
        $region45: #{tpu_custom_call.1} parent=27 // pred_check
          %p355 = pneg %p227
        $region46: #{tpu_custom_call.1} parent=27 // pred_check_branch
          %357 = sbr.rel (%p355) target = $region48
        $region47: #{tpu_custom_call.1} parent=27 // pred_region
          %p358 = scmp.lt.s32.totalorder %s28, 1
          %s359 = scalar_select %p358, %s28, 1
          %s360 = scalar_lea.vmem %s7, %s359
        $region48: #{tpu_custom_call.1} parent=27 // pred_fallthru
          _
      $region28: #{tpu_custom_call.1} parent=5 // pred_fallthru
        _
      %p361 = scmp.le.s32.totalorder 1, %s21
      %p362 = scmp.lt.s32.totalorder %s21, 9
      %p363 = pnand %p361, %p362
      %p364 = pneg %p363
      // Predicated region
      $region49: #{tpu_custom_call.1} parent=5 // pred_check
        _
      $region50: #{tpu_custom_call.1} parent=5 // pred_check_branch
        %366 = sbr.rel (%p363) target = $region52
      $region51: #{tpu_custom_call.1} parent=5 // pred_region
        %s367 = ssub.s32 %s21, 1
        %s368 = sand.u32 %s79, 1
        %s369 = scalar_lea.sflag [#allocation4], %s368
        %s370 = sand.u32 %s79, 1
        %s371 = smul.addr %s370, 64
        %s372 = scalar_lea.vmem [#allocation3], %s371
        // Predicated region
        $region53: #{tpu_custom_call.1} parent=51 // pred_check
          %p373 = pneg %p92
        $region54: #{tpu_custom_call.1} parent=51 // pred_check_branch
          %375 = sbr.rel (%p373) target = $region56
        $region55: #{tpu_custom_call.1} parent=51 // pred_region
          %376 = dma.done %s369, 1024
        $region56: #{tpu_custom_call.1} parent=51 // pred_fallthru
          _
        // Predicated region
        $region57: #{tpu_custom_call.1} parent=51 // pred_check
          %p377 = pneg %p139
        $region58: #{tpu_custom_call.1} parent=51 // pred_check_branch
          %379 = sbr.rel (%p377) target = $region60
        $region59: #{tpu_custom_call.1} parent=51 // pred_region
          %380 = dma.done [#allocation7], 4096
        $region60: #{tpu_custom_call.1} parent=51 // pred_fallthru
          _
        // Predicated region
        $region61: #{tpu_custom_call.1} parent=51 // pred_check
          %p381 = pneg %p160
        $region62: #{tpu_custom_call.1} parent=51 // pred_check_branch
          %383 = sbr.rel (%p381) target = $region64
        $region63: #{tpu_custom_call.1} parent=51 // pred_region
          %384 = dma.done [#allocation7], 4096
        $region64: #{tpu_custom_call.1} parent=51 // pred_fallthru
          _
        %p385 = scmp.lt.s32.totalorder %s31, 1
        %s386 = scalar_select %p385, %s31, 1
        %s387 = smul.addr %s386, 16
        %s388 = smul.addr %s387, 8
        %s389 = scalar_lea.vmem %s0, %s388
        %p390 = pneg %p66
        %p391 = pneg %p63
        %s392 = sand.u32 %s79, 1
        %s393 = scalar_lea.sflag [#allocation4], %s392
        %s394 = sand.u32 %s79, 1
        %s395 = smul.addr %s394, 64
        %s396 = scalar_lea.vmem [#allocation3], %s395
        %p397 = pneg %p92
        %p398 = pneg %p89
        %p399 = scmp.lt.s32.totalorder %s32, 3
        %s400 = scalar_select %p399, %s32, 3
        %s401 = smul.addr %s400, 2
        %s402 = scalar_lea.vmem %s2, %s401
        %p403 = pneg %p118
        %p404 = pneg %p115
        %p405 = pneg %p139
        %p406 = pneg %p136
        %p407 = pneg %p160
        %p408 = pneg %p157
        %p409 = pneg %p181
        %p410 = pneg %p178
        %p411 = scmp.lt.s32.totalorder %s31, 1
        %s412 = scalar_select %p411, %s31, 1
        %s413 = smul.addr %s412, 16
        %s414 = smul.addr %s413, 8
        %s415 = scalar_lea.vmem %s6, %s414
        %p416 = pneg %p207
        %p417 = pneg %p204
        %p418 = scmp.lt.s32.totalorder %s31, 1
        %s419 = scalar_select %p418, %s31, 1
        %s420 = scalar_lea.vmem %s7, %s419
        %p421 = pneg %p233
        %p422 = pneg %p230
        %p423 = pneg %p263
        %p424 = pneg %p260
        %s425 = sand.u32 %s250, 1
        %s426 = scalar_lea.sflag [#allocation5], %s425
        %s427 = sand.u32 %s250, 1
        %s428 = smul.addr %s427, 128
        %s429 = scalar_lea.vmem [#allocation9], %s428
        %p430 = scmp.lt.s32.totalorder %s31, 1
        %s431 = scalar_select %p430, %s31, 1
        %s432 = smul.addr %s431, 16
        %s433 = smul.addr %s432, 8
        %s434 = scalar_lea.vmem %s0, %s433
        %p435 = scmp.lt.s32.totalorder %s32, 3
        %s436 = scalar_select %p435, %s32, 3
        %s437 = smul.addr %s436, 2
        %s438 = scalar_lea.vmem %s2, %s437
        %p439 = scmp.lt.s32.totalorder %s31, 1
        %s440 = scalar_select %p439, %s31, 1
        %s441 = smul.addr %s440, 16
        %s442 = smul.addr %s441, 8
        %s443 = scalar_lea.vmem %s6, %s442
        %p444 = scmp.lt.s32.totalorder %s31, 1
        %s445 = scalar_select %p444, %s31, 1
        %s446 = scalar_lea.vmem %s7, %s445
        %s447 = smul.u32 16, %s33
        %p448 = scmp.eq.s32.totalorder %s33, 0
        // Predicated region
        $region65: #{tpu_custom_call.1} parent=51 // pred_check
          %p449 = pneg %p448
        $region66: #{tpu_custom_call.1} parent=51 // pred_check_branch
          %451 = sbr.rel (%p449) target = $region68
        $region67: #{tpu_custom_call.1} parent=51 // pred_region
          %v452 = vld [vmem:[%s434] sm:$0xff]
          %v453 = vld [vmem:[%s434 + $0x8] sm:$0xff]
          %v454 = vld [vmem:[%s434 + $0x10] sm:$0xff]
          %v455 = vld [vmem:[%s434 + $0x18] sm:$0xff]
          %v456 = vld [vmem:[%s434 + $0x20] sm:$0xff]
          %v457 = vld [vmem:[%s434 + $0x28] sm:$0xff]
          %v458 = vld [vmem:[%s434 + $0x30] sm:$0xff]
          %v459 = vld [vmem:[%s434 + $0x38] sm:$0xff]
          %v460 = vld [vmem:[%s434 + $0x40] sm:$0xff]
          %v461 = vld [vmem:[%s434 + $0x48] sm:$0xff]
          %v462 = vld [vmem:[%s434 + $0x50] sm:$0xff]
          %v463 = vld [vmem:[%s434 + $0x58] sm:$0xff]
          %v464 = vld [vmem:[%s434 + $0x60] sm:$0xff]
          %v465 = vld [vmem:[%s434 + $0x68] sm:$0xff]
          %v466 = vld [vmem:[%s434 + $0x70] sm:$0xff]
          %v467 = vld [vmem:[%s434 + $0x78] sm:$0xff]
          %v468 = vld [vmem:[%s372] sm:$0xff]
          %v469 = vld [vmem:[%s372 + $0x8] sm:$0xff]
          %v470 = vld [vmem:[%s372 + $0x10] sm:$0xff]
          %v471 = vld [vmem:[%s372 + $0x18] sm:$0xff]
          %v472 = vld [vmem:[%s372 + $0x20] sm:$0xff]
          %v473 = vld [vmem:[%s372 + $0x28] sm:$0xff]
          %v474 = vld [vmem:[%s372 + $0x30] sm:$0xff]
          %v475 = vld [vmem:[%s372 + $0x38] sm:$0xff]
          %v476 = vld [vmem:[%s438] sm:$0x3]
          %v478 = vlaneseq
          %v479 = vshrl.u32 %v478, 7
          %v480 = vsub.s32 0, %v479
          %v481 = vrot.slane %v476, %v480
          %v482 = vlaneseq
          %v483 = vshrl.u32 %v482, 7
          %v484 = vsub.s32 1, %v483
          %v485 = vrot.slane %v476, %v484
          %vm488 = vcmask 261120
          %v490 = vsel %vm488, %v452, 0
          %v493 = vsel %vm488, %v453, 0
          %v496 = vsel %vm488, %v454, 0
          %v499 = vsel %vm488, %v455, 0
          %v502 = vsel %vm488, %v456, 0
          %v505 = vsel %vm488, %v457, 0
          %v508 = vsel %vm488, %v458, 0
          %v511 = vsel %vm488, %v459, 0
          %v514 = vsel %vm488, %v460, 0
          %v517 = vsel %vm488, %v461, 0
          %v520 = vsel %vm488, %v462, 0
          %v523 = vsel %vm488, %v463, 0
          %v526 = vsel %vm488, %v464, 0
          %v529 = vsel %vm488, %v465, 0
          %v532 = vsel %vm488, %v466, 0
          %v535 = vsel %vm488, %v467, 0
          %537 = vmatprep.subr.mxu0 %v469
          %538 = vmatpush1.msra.mxu0 %v468
          %539 = vmatprep.subr.mxu0 %v471
          %540 = vmatpush1.msra.mxu0 %v470
          %541 = vmatprep.subr.mxu0 %v473
          %542 = vmatpush1.msra.mxu0 %v472
          %543 = vmatprep.subr.mxu0 %v475
          %544 = vmatpush1.msra.mxu0 %v474
          %545 = vmatprep.subr.mxu0 0.0
          %546 = vmatpush1.msra.mxu0 0.0
          %547 = vmatprep.subr.mxu0 0.0
          %548 = vmatpush1.msra.mxu0 0.0
          %549 = vmatprep.subr.mxu0 0.0
          %550 = vmatpush1.msra.mxu0 0.0
          %551 = vmatprep.subr.mxu0 0.0
          %552 = vmatpush1.msra.mxu0 0.0
          %553 = vmatprep.subr.mxu0 0.0
          %554 = vmatpush1.msra.mxu0 0.0
          %555 = vmatprep.subr.mxu0 0.0
          %556 = vmatpush1.msra.mxu0 0.0
          %557 = vmatprep.subr.mxu0 0.0
          %558 = vmatpush1.msra.mxu0 0.0
          %559 = vmatprep.subr.mxu0 0.0
          %560 = vmatpush1.msra.mxu0 0.0
          %561 = vmatprep.subr.mxu0 0.0
          %562 = vmatpush1.msra.mxu0 0.0
          %563 = vmatprep.subr.mxu0 0.0
          %564 = vmatpush1.msra.mxu0 0.0
          %565 = vmatprep.subr.mxu0 0.0
          %566 = vmatpush1.msra.mxu0 0.0
          %567 = vmatprep.subr.mxu0 0.0
          %568 = vmatpush1.msra.mxu0 0.0
          %569 = vmatprep.subr.mxu0 0.0
          %570 = vmatpush1.msra.mxu0 0.0
          %571 = vmatprep.subr.mxu0 0.0
          %572 = vmatpush1.msra.mxu0 0.0
          %573 = vmatprep.subr.mxu0 0.0
          %574 = vmatpush1.msra.mxu0 0.0
          %575 = vmatprep.subr.mxu0 0.0
          %576 = vmatpush1.msra.mxu0 0.0
          %577 = vmatprep.subr.mxu0 0.0
          %578 = vmatpush1.msra.mxu0 0.0
          %579 = vmatprep.subr.mxu0 0.0
          %580 = vmatpush1.msra.mxu0 0.0
          %581 = vmatprep.subr.mxu0 0.0
          %582 = vmatpush1.msra.mxu0 0.0
          %583 = vmatprep.subr.mxu0 0.0
          %584 = vmatpush1.msra.mxu0 0.0
          %585 = vmatprep.subr.mxu0 0.0
          %586 = vmatpush1.msra.mxu0 0.0
          %587 = vmatprep.subr.mxu0 0.0
          %588 = vmatpush1.msra.mxu0 0.0
          %589 = vmatprep.subr.mxu0 0.0
          %590 = vmatpush1.msra.mxu0 0.0
          %591 = vmatprep.subr.mxu0 0.0
          %592 = vmatpush1.msra.mxu0 0.0
          %593 = vmatprep.subr.mxu0 0.0
          %594 = vmatpush1.msra.mxu0 0.0
          %595 = vmatprep.subr.mxu0 0.0
          %596 = vmatpush1.msra.mxu0 0.0
          %597 = vmatprep.subr.mxu0 0.0
          %598 = vmatpush1.msra.mxu0 0.0
          %599 = vmatprep.subr.mxu0 0.0
          %600 = vmatpush1.msra.mxu0 0.0
          %601 = vmatprep.mubr.f32.mxu0 0.0
          %602 = vmatmul.mubr.f32.gmra.mrb[0].mxu0 %v490
          %v603 = vpop.f32.mrb[0].mxu0
          %v604 = vadd.f32 %v481, %v603
          %v605 = vpop.f32.mrb[0].mxu0
          %v606 = vadd.f32 %v485, %v605
          %607 = vmatprep.mubr.f32.mxu0 0.0
          %608 = vmatmul.mubr.f32.gmra.mrb[0].mxu0 %v493
          %v609 = vpop.f32.mrb[0].mxu0
          %v610 = vadd.f32 %v481, %v609
          %v611 = vpop.f32.mrb[0].mxu0
          %v612 = vadd.f32 %v485, %v611
          %613 = vmatprep.mubr.f32.mxu0 0.0
          %614 = vmatmul.mubr.f32.gmra.mrb[0].mxu0 %v496
          %v615 = vpop.f32.mrb[0].mxu0
          %v616 = vadd.f32 %v481, %v615
          %v617 = vpop.f32.mrb[0].mxu0
          %v618 = vadd.f32 %v485, %v617
          %619 = vmatprep.mubr.f32.mxu0 0.0
          %620 = vmatmul.mubr.f32.gmra.mrb[0].mxu0 %v499
          %v621 = vpop.f32.mrb[0].mxu0
          %v622 = vadd.f32 %v481, %v621
          %v623 = vpop.f32.mrb[0].mxu0
          %v624 = vadd.f32 %v485, %v623
          %625 = vmatprep.mubr.f32.mxu0 0.0
          %626 = vmatmul.mubr.f32.gmra.mrb[0].mxu0 %v502
          %v627 = vpop.f32.mrb[0].mxu0
          %v628 = vadd.f32 %v481, %v627
          %v629 = vpop.f32.mrb[0].mxu0
          %v630 = vadd.f32 %v485, %v629
          %631 = vmatprep.mubr.f32.mxu0 0.0
          %632 = vmatmul.mubr.f32.gmra.mrb[0].mxu0 %v505
          %v633 = vpop.f32.mrb[0].mxu0
          %v634 = vadd.f32 %v481, %v633
          %v635 = vpop.f32.mrb[0].mxu0
          %v636 = vadd.f32 %v485, %v635
          %637 = vmatprep.mubr.f32.mxu0 0.0
          %638 = vmatmul.mubr.f32.gmra.mrb[0].mxu0 %v508
          %v639 = vpop.f32.mrb[0].mxu0
          %v640 = vadd.f32 %v481, %v639
          %v641 = vpop.f32.mrb[0].mxu0
          %v642 = vadd.f32 %v485, %v641
          %643 = vmatprep.mubr.f32.mxu0 0.0
          %644 = vmatmul.mubr.f32.gmra.mrb[0].mxu0 %v511
          %v645 = vpop.f32.mrb[0].mxu0
          %v646 = vadd.f32 %v481, %v645
          %v647 = vpop.f32.mrb[0].mxu0
          %v648 = vadd.f32 %v485, %v647
          %649 = vmatprep.mubr.f32.mxu0 0.0
          %650 = vmatmul.mubr.f32.gmra.mrb[0].mxu0 %v514
          %v651 = vpop.f32.mrb[0].mxu0
          %v652 = vadd.f32 %v481, %v651
          %v653 = vpop.f32.mrb[0].mxu0
          %v654 = vadd.f32 %v485, %v653
          %655 = vmatprep.mubr.f32.mxu0 0.0
          %656 = vmatmul.mubr.f32.gmra.mrb[0].mxu0 %v517
          %v657 = vpop.f32.mrb[0].mxu0
          %v658 = vadd.f32 %v481, %v657
          %v659 = vpop.f32.mrb[0].mxu0
          %v660 = vadd.f32 %v485, %v659
          %661 = vmatprep.mubr.f32.mxu0 0.0
          %662 = vmatmul.mubr.f32.gmra.mrb[0].mxu0 %v520
          %v663 = vpop.f32.mrb[0].mxu0
          %v664 = vadd.f32 %v481, %v663
          %v665 = vpop.f32.mrb[0].mxu0
          %v666 = vadd.f32 %v485, %v665
          %667 = vmatprep.mubr.f32.mxu0 0.0
          %668 = vmatmul.mubr.f32.gmra.mrb[0].mxu0 %v523
          %v669 = vpop.f32.mrb[0].mxu0
          %v670 = vadd.f32 %v481, %v669
          %v671 = vpop.f32.mrb[0].mxu0
          %v672 = vadd.f32 %v485, %v671
          %673 = vmatprep.mubr.f32.mxu0 0.0
          %674 = vmatmul.mubr.f32.gmra.mrb[0].mxu0 %v526
          %v675 = vpop.f32.mrb[0].mxu0
          %v676 = vadd.f32 %v481, %v675
          %v677 = vpop.f32.mrb[0].mxu0
          %v678 = vadd.f32 %v485, %v677
          %679 = vmatprep.mubr.f32.mxu0 0.0
          %680 = vmatmul.mubr.f32.gmra.mrb[0].mxu0 %v529
          %v681 = vpop.f32.mrb[0].mxu0
          %v682 = vadd.f32 %v481, %v681
          %v683 = vpop.f32.mrb[0].mxu0
          %v684 = vadd.f32 %v485, %v683
          %685 = vmatprep.mubr.f32.mxu0 0.0
          %686 = vmatmul.mubr.f32.gmra.mrb[0].mxu0 %v532
          %v687 = vpop.f32.mrb[0].mxu0
          %v688 = vadd.f32 %v481, %v687
          %v689 = vpop.f32.mrb[0].mxu0
          %v690 = vadd.f32 %v485, %v689
          %691 = vmatprep.mubr.f32.mxu0 0.0
          %692 = vmatmul.mubr.f32.gmra.mrb[0].mxu0 %v535
          %v693 = vpop.f32.mrb[0].mxu0
          %v694 = vadd.f32 %v481, %v693
          %v695 = vpop.f32.mrb[0].mxu0
          %v696 = vadd.f32 %v485, %v695
          %697 = vdwg.mxu0
          %v698 = vld [vmem:[#allocation6] sm:$0xff]
          %v699 = vld [vmem:[#allocation6 + $0x8] sm:$0xff]
          %v700 = vld [vmem:[#allocation6 + $0x10] sm:$0xff]
          %v701 = vld [vmem:[#allocation6 + $0x18] sm:$0xff]
          %v702 = vld [vmem:[#allocation6 + $0x20] sm:$0xff]
          %v703 = vld [vmem:[#allocation6 + $0x28] sm:$0xff]
          %v704 = vld [vmem:[#allocation6 + $0x30] sm:$0xff]
          %v705 = vld [vmem:[#allocation6 + $0x38] sm:$0xff]
          %v706 = vld [vmem:[#allocation6 + $0x40] sm:$0xff]
          %v707 = vld [vmem:[#allocation6 + $0x48] sm:$0xff]
          %v708 = vld [vmem:[#allocation6 + $0x50] sm:$0xff]
          %v709 = vld [vmem:[#allocation6 + $0x58] sm:$0xff]
          %v710 = vld [vmem:[#allocation6 + $0x60] sm:$0xff]
          %v711 = vld [vmem:[#allocation6 + $0x68] sm:$0xff]
          %v712 = vld [vmem:[#allocation6 + $0x70] sm:$0xff]
          %v713 = vld [vmem:[#allocation6 + $0x78] sm:$0xff]
          %v714 = vld [vmem:[#allocation6 + $0x80] sm:$0xff]
          %v715 = vld [vmem:[#allocation6 + $0x88] sm:$0xff]
          %v716 = vld [vmem:[#allocation6 + $0x90] sm:$0xff]
          %v717 = vld [vmem:[#allocation6 + $0x98] sm:$0xff]
          %v718 = vld [vmem:[#allocation6 + $0xa0] sm:$0xff]
          %v719 = vld [vmem:[#allocation6 + $0xa8] sm:$0xff]
          %v720 = vld [vmem:[#allocation6 + $0xb0] sm:$0xff]
          %v721 = vld [vmem:[#allocation6 + $0xb8] sm:$0xff]
          %v722 = vld [vmem:[#allocation6 + $0xc0] sm:$0xff]
          %v723 = vld [vmem:[#allocation6 + $0xc8] sm:$0xff]
          %v724 = vld [vmem:[#allocation6 + $0xd0] sm:$0xff]
          %v725 = vld [vmem:[#allocation6 + $0xd8] sm:$0xff]
          %v726 = vld [vmem:[#allocation6 + $0xe0] sm:$0xff]
          %v727 = vld [vmem:[#allocation6 + $0xe8] sm:$0xff]
          %v728 = vld [vmem:[#allocation6 + $0xf0] sm:$0xff]
          %v729 = vld [vmem:[#allocation6 + $0xf8] sm:$0xff]
          %v730 = vmul.f32 %v604, %v698
          %v731 = vmul.f32 %v606, %v699
          %v732 = vmul.f32 %v610, %v700
          %v733 = vmul.f32 %v612, %v701
          %v734 = vmul.f32 %v616, %v702
          %v735 = vmul.f32 %v618, %v703
          %v736 = vmul.f32 %v622, %v704
          %v737 = vmul.f32 %v624, %v705
          %v738 = vmul.f32 %v628, %v706
          %v739 = vmul.f32 %v630, %v707
          %v740 = vmul.f32 %v634, %v708
          %v741 = vmul.f32 %v636, %v709
          %v742 = vmul.f32 %v640, %v710
          %v743 = vmul.f32 %v642, %v711
          %v744 = vmul.f32 %v646, %v712
          %v745 = vmul.f32 %v648, %v713
          %v746 = vmul.f32 %v652, %v714
          %v747 = vmul.f32 %v654, %v715
          %v748 = vmul.f32 %v658, %v716
          %v749 = vmul.f32 %v660, %v717
          %v750 = vmul.f32 %v664, %v718
          %v751 = vmul.f32 %v666, %v719
          %v752 = vmul.f32 %v670, %v720
          %v753 = vmul.f32 %v672, %v721
          %v754 = vmul.f32 %v676, %v722
          %v755 = vmul.f32 %v678, %v723
          %v756 = vmul.f32 %v682, %v724
          %v757 = vmul.f32 %v684, %v725
          %v758 = vmul.f32 %v688, %v726
          %v759 = vmul.f32 %v690, %v727
          %v760 = vmul.f32 %v694, %v728
          %v761 = vmul.f32 %v696, %v729
          %v762 = vld [vmem:[%s5] sm:$0xff]
          %v763 = vld [vmem:[%s5 + $0x8] sm:$0xff]
          %v764 = vld [vmem:[%s5 + $0x10] sm:$0xff]
          %v765 = vld [vmem:[%s5 + $0x18] sm:$0xff]
          %v766 = vld [vmem:[%s5 + $0x20] sm:$0xff]
          %v767 = vld [vmem:[%s5 + $0x28] sm:$0xff]
          %v768 = vld [vmem:[%s5 + $0x30] sm:$0xff]
          %v769 = vld [vmem:[%s5 + $0x38] sm:$0xff]
          %v770 = vld [vmem:[%s5 + $0x40] sm:$0xff]
          %v771 = vld [vmem:[%s5 + $0x48] sm:$0xff]
          %v772 = vld [vmem:[%s5 + $0x50] sm:$0xff]
          %v773 = vld [vmem:[%s5 + $0x58] sm:$0xff]
          %v774 = vld [vmem:[%s5 + $0x60] sm:$0xff]
          %v775 = vld [vmem:[%s5 + $0x68] sm:$0xff]
          %v776 = vld [vmem:[%s5 + $0x70] sm:$0xff]
          %v777 = vld [vmem:[%s5 + $0x78] sm:$0xff]
          %v778 = vld [vmem:[%s5 + $0x80] sm:$0xff]
          %v779 = vld [vmem:[%s5 + $0x88] sm:$0xff]
          %v780 = vld [vmem:[%s5 + $0x90] sm:$0xff]
          %v781 = vld [vmem:[%s5 + $0x98] sm:$0xff]
          %v782 = vld [vmem:[%s5 + $0xa0] sm:$0xff]
          %v783 = vld [vmem:[%s5 + $0xa8] sm:$0xff]
          %v784 = vld [vmem:[%s5 + $0xb0] sm:$0xff]
          %v785 = vld [vmem:[%s5 + $0xb8] sm:$0xff]
          %v786 = vld [vmem:[%s5 + $0xc0] sm:$0xff]
          %v787 = vld [vmem:[%s5 + $0xc8] sm:$0xff]
          %v788 = vld [vmem:[%s5 + $0xd0] sm:$0xff]
          %v789 = vld [vmem:[%s5 + $0xd8] sm:$0xff]
          %v790 = vld [vmem:[%s5 + $0xe0] sm:$0xff]
          %v791 = vld [vmem:[%s5 + $0xe8] sm:$0xff]
          %v792 = vld [vmem:[%s5 + $0xf0] sm:$0xff]
          %v793 = vld [vmem:[%s5 + $0xf8] sm:$0xff]
          %v794 = vld [vmem:[%s5 + $0x100] sm:$0xff]
          %v795 = vld [vmem:[%s5 + $0x108] sm:$0xff]
          %v796 = vld [vmem:[%s5 + $0x110] sm:$0xff]
          %v797 = vld [vmem:[%s5 + $0x118] sm:$0xff]
          %v798 = vld [vmem:[%s5 + $0x120] sm:$0xff]
          %v799 = vld [vmem:[%s5 + $0x128] sm:$0xff]
          %v800 = vld [vmem:[%s5 + $0x130] sm:$0xff]
          %v801 = vld [vmem:[%s5 + $0x138] sm:$0xff]
          %v802 = vld [vmem:[%s5 + $0x140] sm:$0xff]
          %v803 = vld [vmem:[%s5 + $0x148] sm:$0xff]
          %v804 = vld [vmem:[%s5 + $0x150] sm:$0xff]
          %v805 = vld [vmem:[%s5 + $0x158] sm:$0xff]
          %v806 = vld [vmem:[%s5 + $0x160] sm:$0xff]
          %v807 = vld [vmem:[%s5 + $0x168] sm:$0xff]
          %v808 = vld [vmem:[%s5 + $0x170] sm:$0xff]
          %v809 = vld [vmem:[%s5 + $0x178] sm:$0xff]
          %v810 = vld [vmem:[%s5 + $0x180] sm:$0xff]
          %v811 = vld [vmem:[%s5 + $0x188] sm:$0xff]
          %v812 = vld [vmem:[%s5 + $0x190] sm:$0xff]
          %v813 = vld [vmem:[%s5 + $0x198] sm:$0xff]
          %v814 = vld [vmem:[%s5 + $0x1a0] sm:$0xff]
          %v815 = vld [vmem:[%s5 + $0x1a8] sm:$0xff]
          %v816 = vld [vmem:[%s5 + $0x1b0] sm:$0xff]
          %v817 = vld [vmem:[%s5 + $0x1b8] sm:$0xff]
          %v818 = vld [vmem:[%s5 + $0x1c0] sm:$0xff]
          %v819 = vld [vmem:[%s5 + $0x1c8] sm:$0xff]
          %v820 = vld [vmem:[%s5 + $0x1d0] sm:$0xff]
          %v821 = vld [vmem:[%s5 + $0x1d8] sm:$0xff]
          %v822 = vld [vmem:[%s5 + $0x1e0] sm:$0xff]
          %v823 = vld [vmem:[%s5 + $0x1e8] sm:$0xff]
          %v824 = vld [vmem:[%s5 + $0x1f0] sm:$0xff]
          %v825 = vld [vmem:[%s5 + $0x1f8] sm:$0xff]
          %826 = vmatprep.subr.mxu0 %v763
          %827 = vmatpush1.msra.mxu0 %v762
          %828 = vmatprep.subr.mxu0 %v765
          %829 = vmatpush1.msra.mxu0 %v764
          %830 = vmatprep.subr.mxu0 %v767
          %831 = vmatpush1.msra.mxu0 %v766
          %832 = vmatprep.subr.mxu0 %v769
          %833 = vmatpush1.msra.mxu0 %v768
          %834 = vmatprep.subr.mxu0 %v771
          %835 = vmatpush1.msra.mxu0 %v770
          %836 = vmatprep.subr.mxu0 %v773
          %837 = vmatpush1.msra.mxu0 %v772
          %838 = vmatprep.subr.mxu0 %v775
          %839 = vmatpush1.msra.mxu0 %v774
          %840 = vmatprep.subr.mxu0 %v777
          %841 = vmatpush1.msra.mxu0 %v776
          %842 = vmatprep.subr.mxu0 %v779
          %843 = vmatpush1.msra.mxu0 %v778
          %844 = vmatprep.subr.mxu0 %v781
          %845 = vmatpush1.msra.mxu0 %v780
          %846 = vmatprep.subr.mxu0 %v783
          %847 = vmatpush1.msra.mxu0 %v782
          %848 = vmatprep.subr.mxu0 %v785
          %849 = vmatpush1.msra.mxu0 %v784
          %850 = vmatprep.subr.mxu0 %v787
          %851 = vmatpush1.msra.mxu0 %v786
          %852 = vmatprep.subr.mxu0 %v789
          %853 = vmatpush1.msra.mxu0 %v788
          %854 = vmatprep.subr.mxu0 %v791
          %855 = vmatpush1.msra.mxu0 %v790
          %856 = vmatprep.subr.mxu0 %v793
          %857 = vmatpush1.msra.mxu0 %v792
          %858 = vmatprep.subr.mxu0 %v795
          %859 = vmatpush1.msra.mxu0 %v794
          %860 = vmatprep.subr.mxu0 %v797
          %861 = vmatpush1.msra.mxu0 %v796
          %862 = vmatprep.subr.mxu0 %v799
          %863 = vmatpush1.msra.mxu0 %v798
          %864 = vmatprep.subr.mxu0 %v801
          %865 = vmatpush1.msra.mxu0 %v800
          %866 = vmatprep.subr.mxu0 %v803
          %867 = vmatpush1.msra.mxu0 %v802
          %868 = vmatprep.subr.mxu0 %v805
          %869 = vmatpush1.msra.mxu0 %v804
          %870 = vmatprep.subr.mxu0 %v807
          %871 = vmatpush1.msra.mxu0 %v806
          %872 = vmatprep.subr.mxu0 %v809
          %873 = vmatpush1.msra.mxu0 %v808
          %874 = vmatprep.subr.mxu0 %v811
          %875 = vmatpush1.msra.mxu0 %v810
          %876 = vmatprep.subr.mxu0 %v813
          %877 = vmatpush1.msra.mxu0 %v812
          %878 = vmatprep.subr.mxu0 %v815
          %879 = vmatpush1.msra.mxu0 %v814
          %880 = vmatprep.subr.mxu0 %v817
          %881 = vmatpush1.msra.mxu0 %v816
          %882 = vmatprep.subr.mxu0 %v819
          %883 = vmatpush1.msra.mxu0 %v818
          %884 = vmatprep.subr.mxu0 %v821
          %885 = vmatpush1.msra.mxu0 %v820
          %886 = vmatprep.subr.mxu0 %v823
          %887 = vmatpush1.msra.mxu0 %v822
          %888 = vmatprep.subr.mxu0 %v825
          %889 = vmatpush1.msra.mxu0 %v824
          %890 = vmatprep.mubr.f32.mxu0 %v606
          %891 = vmatmul.mubr.f32.gmra.mrb[0].mxu0 %v604
          %v892 = vpop.f32.mrb[0].mxu0
          %v893 = vadd.f32 0.0, %v892
          %v894 = vpop.f32.mrb[0].mxu0
          %v895 = vadd.f32 0.0, %v894
          %896 = vmatprep.mubr.f32.mxu0 %v612
          %897 = vmatmul.mubr.f32.gmra.mrb[0].mxu0 %v610
          %v898 = vpop.f32.mrb[0].mxu0
          %v899 = vadd.f32 0.0, %v898
          %v900 = vpop.f32.mrb[0].mxu0
          %v901 = vadd.f32 0.0, %v900
          %902 = vmatprep.mubr.f32.mxu0 %v618
          %903 = vmatmul.mubr.f32.gmra.mrb[0].mxu0 %v616
          %v904 = vpop.f32.mrb[0].mxu0
          %v905 = vadd.f32 0.0, %v904
          %v906 = vpop.f32.mrb[0].mxu0
          %v907 = vadd.f32 0.0, %v906
          %908 = vmatprep.mubr.f32.mxu0 %v624
          %909 = vmatmul.mubr.f32.gmra.mrb[0].mxu0 %v622
          %v910 = vpop.f32.mrb[0].mxu0
          %v911 = vadd.f32 0.0, %v910
          %v912 = vpop.f32.mrb[0].mxu0
          %v913 = vadd.f32 0.0, %v912
          %914 = vmatprep.mubr.f32.mxu0 %v630
          %915 = vmatmul.mubr.f32.gmra.mrb[0].mxu0 %v628
          %v916 = vpop.f32.mrb[0].mxu0
          %v917 = vadd.f32 0.0, %v916
          %v918 = vpop.f32.mrb[0].mxu0
          %v919 = vadd.f32 0.0, %v918
          %920 = vmatprep.mubr.f32.mxu0 %v636
          %921 = vmatmul.mubr.f32.gmra.mrb[0].mxu0 %v634
          %v922 = vpop.f32.mrb[0].mxu0
          %v923 = vadd.f32 0.0, %v922
          %v924 = vpop.f32.mrb[0].mxu0
          %v925 = vadd.f32 0.0, %v924
          %926 = vmatprep.mubr.f32.mxu0 %v642
          %927 = vmatmul.mubr.f32.gmra.mrb[0].mxu0 %v640
          %v928 = vpop.f32.mrb[0].mxu0
          %v929 = vadd.f32 0.0, %v928
          %v930 = vpop.f32.mrb[0].mxu0
          %v931 = vadd.f32 0.0, %v930
          %932 = vmatprep.mubr.f32.mxu0 %v648
          %933 = vmatmul.mubr.f32.gmra.mrb[0].mxu0 %v646
          %v934 = vpop.f32.mrb[0].mxu0
          %v935 = vadd.f32 0.0, %v934
          %v936 = vpop.f32.mrb[0].mxu0
          %v937 = vadd.f32 0.0, %v936
          %938 = vmatprep.mubr.f32.mxu0 %v654
          %939 = vmatmul.mubr.f32.gmra.mrb[0].mxu0 %v652
          %v940 = vpop.f32.mrb[0].mxu0
          %v941 = vadd.f32 0.0, %v940
          %v942 = vpop.f32.mrb[0].mxu0
          %v943 = vadd.f32 0.0, %v942
          %944 = vmatprep.mubr.f32.mxu0 %v660
          %945 = vmatmul.mubr.f32.gmra.mrb[0].mxu0 %v658
          %v946 = vpop.f32.mrb[0].mxu0
          %v947 = vadd.f32 0.0, %v946
          %v948 = vpop.f32.mrb[0].mxu0
          %v949 = vadd.f32 0.0, %v948
          %950 = vmatprep.mubr.f32.mxu0 %v666
          %951 = vmatmul.mubr.f32.gmra.mrb[0].mxu0 %v664
          %v952 = vpop.f32.mrb[0].mxu0
          %v953 = vadd.f32 0.0, %v952
          %v954 = vpop.f32.mrb[0].mxu0
          %v955 = vadd.f32 0.0, %v954
          %956 = vmatprep.mubr.f32.mxu0 %v672
          %957 = vmatmul.mubr.f32.gmra.mrb[0].mxu0 %v670
          %v958 = vpop.f32.mrb[0].mxu0
          %v959 = vadd.f32 0.0, %v958
          %v960 = vpop.f32.mrb[0].mxu0
          %v961 = vadd.f32 0.0, %v960
          %962 = vmatprep.mubr.f32.mxu0 %v678
          %963 = vmatmul.mubr.f32.gmra.mrb[0].mxu0 %v676
          %v964 = vpop.f32.mrb[0].mxu0
          %v965 = vadd.f32 0.0, %v964
          %v966 = vpop.f32.mrb[0].mxu0
          %v967 = vadd.f32 0.0, %v966
          %968 = vmatprep.mubr.f32.mxu0 %v684
          %969 = vmatmul.mubr.f32.gmra.mrb[0].mxu0 %v682
          %v970 = vpop.f32.mrb[0].mxu0
          %v971 = vadd.f32 0.0, %v970
          %v972 = vpop.f32.mrb[0].mxu0
          %v973 = vadd.f32 0.0, %v972
          %974 = vmatprep.mubr.f32.mxu0 %v690
          %975 = vmatmul.mubr.f32.gmra.mrb[0].mxu0 %v688
          %v976 = vpop.f32.mrb[0].mxu0
          %v977 = vadd.f32 0.0, %v976
          %v978 = vpop.f32.mrb[0].mxu0
          %v979 = vadd.f32 0.0, %v978
          %980 = vmatprep.mubr.f32.mxu0 %v696
          %981 = vmatmul.mubr.f32.gmra.mrb[0].mxu0 %v694
          %v982 = vpop.f32.mrb[0].mxu0
          %v983 = vadd.f32 0.0, %v982
          %v984 = vpop.f32.mrb[0].mxu0
          %v985 = vadd.f32 0.0, %v984
          %986 = vdwg.mxu0
          %v987 = vld [vmem:[#allocation8] sm:$0xff]
          %v988 = vld [vmem:[#allocation8 + $0x8] sm:$0xff]
          %v989 = vld [vmem:[#allocation8 + $0x10] sm:$0xff]
          %v990 = vld [vmem:[#allocation8 + $0x18] sm:$0xff]
          %v991 = vld [vmem:[#allocation8 + $0x20] sm:$0xff]
          %v992 = vld [vmem:[#allocation8 + $0x28] sm:$0xff]
          %v993 = vld [vmem:[#allocation8 + $0x30] sm:$0xff]
          %v994 = vld [vmem:[#allocation8 + $0x38] sm:$0xff]
          %v995 = vld [vmem:[#allocation8 + $0x40] sm:$0xff]
          %v996 = vld [vmem:[#allocation8 + $0x48] sm:$0xff]
          %v997 = vld [vmem:[#allocation8 + $0x50] sm:$0xff]
          %v998 = vld [vmem:[#allocation8 + $0x58] sm:$0xff]
          %v999 = vld [vmem:[#allocation8 + $0x60] sm:$0xff]
          %v1000 = vld [vmem:[#allocation8 + $0x68] sm:$0xff]
          %v1001 = vld [vmem:[#allocation8 + $0x70] sm:$0xff]
          %v1002 = vld [vmem:[#allocation8 + $0x78] sm:$0xff]
          %v1003 = vld [vmem:[#allocation8 + $0x80] sm:$0xff]
          %v1004 = vld [vmem:[#allocation8 + $0x88] sm:$0xff]
          %v1005 = vld [vmem:[#allocation8 + $0x90] sm:$0xff]
          %v1006 = vld [vmem:[#allocation8 + $0x98] sm:$0xff]
          %v1007 = vld [vmem:[#allocation8 + $0xa0] sm:$0xff]
          %v1008 = vld [vmem:[#allocation8 + $0xa8] sm:$0xff]
          %v1009 = vld [vmem:[#allocation8 + $0xb0] sm:$0xff]
          %v1010 = vld [vmem:[#allocation8 + $0xb8] sm:$0xff]
          %v1011 = vld [vmem:[#allocation8 + $0xc0] sm:$0xff]
          %v1012 = vld [vmem:[#allocation8 + $0xc8] sm:$0xff]
          %v1013 = vld [vmem:[#allocation8 + $0xd0] sm:$0xff]
          %v1014 = vld [vmem:[#allocation8 + $0xd8] sm:$0xff]
          %v1015 = vld [vmem:[#allocation8 + $0xe0] sm:$0xff]
          %v1016 = vld [vmem:[#allocation8 + $0xe8] sm:$0xff]
          %v1017 = vld [vmem:[#allocation8 + $0xf0] sm:$0xff]
          %v1018 = vld [vmem:[#allocation8 + $0xf8] sm:$0xff]
          %v1019 = vmul.f32 %v893, %v987
          %v1020 = vmul.f32 %v895, %v988
          %v1021 = vmul.f32 %v899, %v989
          %v1022 = vmul.f32 %v901, %v990
          %v1023 = vmul.f32 %v905, %v991
          %v1024 = vmul.f32 %v907, %v992
          %v1025 = vmul.f32 %v911, %v993
          %v1026 = vmul.f32 %v913, %v994
          %v1027 = vmul.f32 %v917, %v995
          %v1028 = vmul.f32 %v919, %v996
          %v1029 = vmul.f32 %v923, %v997
          %v1030 = vmul.f32 %v925, %v998
          %v1031 = vmul.f32 %v929, %v999
          %v1032 = vmul.f32 %v931, %v1000
          %v1033 = vmul.f32 %v935, %v1001
          %v1034 = vmul.f32 %v937, %v1002
          %v1035 = vmul.f32 %v941, %v1003
          %v1036 = vmul.f32 %v943, %v1004
          %v1037 = vmul.f32 %v947, %v1005
          %v1038 = vmul.f32 %v949, %v1006
          %v1039 = vmul.f32 %v953, %v1007
          %v1040 = vmul.f32 %v955, %v1008
          %v1041 = vmul.f32 %v959, %v1009
          %v1042 = vmul.f32 %v961, %v1010
          %v1043 = vmul.f32 %v965, %v1011
          %v1044 = vmul.f32 %v967, %v1012
          %v1045 = vmul.f32 %v971, %v1013
          %v1046 = vmul.f32 %v973, %v1014
          %v1047 = vmul.f32 %v977, %v1015
          %v1048 = vmul.f32 %v979, %v1016
          %v1049 = vmul.f32 %v983, %v1017
          %v1050 = vmul.f32 %v985, %v1018
          %v1051 = vadd.f32 %v730, %v1019
          %v1052 = vadd.f32 %v731, %v1020
          %v1053 = vadd.f32 %v732, %v1021
          %v1054 = vadd.f32 %v733, %v1022
          %v1055 = vadd.f32 %v734, %v1023
          %v1056 = vadd.f32 %v735, %v1024
          %v1057 = vadd.f32 %v736, %v1025
          %v1058 = vadd.f32 %v737, %v1026
          %v1059 = vadd.f32 %v738, %v1027
          %v1060 = vadd.f32 %v739, %v1028
          %v1061 = vadd.f32 %v740, %v1029
          %v1062 = vadd.f32 %v741, %v1030
          %v1063 = vadd.f32 %v742, %v1031
          %v1064 = vadd.f32 %v743, %v1032
          %v1065 = vadd.f32 %v744, %v1033
          %v1066 = vadd.f32 %v745, %v1034
          %v1067 = vadd.f32 %v746, %v1035
          %v1068 = vadd.f32 %v747, %v1036
          %v1069 = vadd.f32 %v748, %v1037
          %v1070 = vadd.f32 %v749, %v1038
          %v1071 = vadd.f32 %v750, %v1039
          %v1072 = vadd.f32 %v751, %v1040
          %v1073 = vadd.f32 %v752, %v1041
          %v1074 = vadd.f32 %v753, %v1042
          %v1075 = vadd.f32 %v754, %v1043
          %v1076 = vadd.f32 %v755, %v1044
          %v1077 = vadd.f32 %v756, %v1045
          %v1078 = vadd.f32 %v757, %v1046
          %v1079 = vadd.f32 %v758, %v1047
          %v1080 = vadd.f32 %v759, %v1048
          %v1081 = vadd.f32 %v760, %v1049
          %v1082 = vadd.f32 %v761, %v1050
          %v1083 = vmul.f32 %v1051, 0.25
          %v1084 = vmul.f32 %v1053, 0.25
          %v1085 = vmul.f32 %v1055, 0.25
          %v1086 = vmul.f32 %v1057, 0.25
          %v1087 = vmul.f32 %v1059, 0.25
          %v1088 = vmul.f32 %v1061, 0.25
          %v1089 = vmul.f32 %v1063, 0.25
          %v1090 = vmul.f32 %v1065, 0.25
          %v1091 = vmul.f32 %v1067, 0.25
          %v1092 = vmul.f32 %v1069, 0.25
          %v1093 = vmul.f32 %v1071, 0.25
          %v1094 = vmul.f32 %v1073, 0.25
          %v1095 = vmul.f32 %v1075, 0.25
          %v1096 = vmul.f32 %v1077, 0.25
          %v1097 = vmul.f32 %v1079, 0.25
          %v1098 = vmul.f32 %v1081, 0.25
          %1099 = vst [vmem:[#allocation2] sm:$0xff] %v1083
          %1100 = vst [vmem:[#allocation2 + $0x10] sm:$0xff] %v1084
          %1101 = vst [vmem:[#allocation2 + $0x20] sm:$0xff] %v1085
          %1102 = vst [vmem:[#allocation2 + $0x30] sm:$0xff] %v1086
          %1103 = vst [vmem:[#allocation2 + $0x40] sm:$0xff] %v1087
          %1104 = vst [vmem:[#allocation2 + $0x50] sm:$0xff] %v1088
          %1105 = vst [vmem:[#allocation2 + $0x60] sm:$0xff] %v1089
          %1106 = vst [vmem:[#allocation2 + $0x70] sm:$0xff] %v1090
          %1107 = vst [vmem:[#allocation2 + $0x80] sm:$0xff] %v1091
          %1108 = vst [vmem:[#allocation2 + $0x90] sm:$0xff] %v1092
          %1109 = vst [vmem:[#allocation2 + $0xa0] sm:$0xff] %v1093
          %1110 = vst [vmem:[#allocation2 + $0xb0] sm:$0xff] %v1094
          %1111 = vst [vmem:[#allocation2 + $0xc0] sm:$0xff] %v1095
          %1112 = vst [vmem:[#allocation2 + $0xd0] sm:$0xff] %v1096
          %1113 = vst [vmem:[#allocation2 + $0xe0] sm:$0xff] %v1097
          %1114 = vst [vmem:[#allocation2 + $0xf0] sm:$0xff] %v1098
          %v1115 = vld [vmem:[%s443] sm:$0xff]
          %v1116 = vld [vmem:[%s443 + $0x8] sm:$0xff]
          %v1117 = vld [vmem:[%s443 + $0x10] sm:$0xff]
          %v1118 = vld [vmem:[%s443 + $0x18] sm:$0xff]
          %v1119 = vld [vmem:[%s443 + $0x20] sm:$0xff]
          %v1120 = vld [vmem:[%s443 + $0x28] sm:$0xff]
          %v1121 = vld [vmem:[%s443 + $0x30] sm:$0xff]
          %v1122 = vld [vmem:[%s443 + $0x38] sm:$0xff]
          %v1123 = vld [vmem:[%s443 + $0x40] sm:$0xff]
          %v1124 = vld [vmem:[%s443 + $0x48] sm:$0xff]
          %v1125 = vld [vmem:[%s443 + $0x50] sm:$0xff]
          %v1126 = vld [vmem:[%s443 + $0x58] sm:$0xff]
          %v1127 = vld [vmem:[%s443 + $0x60] sm:$0xff]
          %v1128 = vld [vmem:[%s443 + $0x68] sm:$0xff]
          %v1129 = vld [vmem:[%s443 + $0x70] sm:$0xff]
          %v1130 = vld [vmem:[%s443 + $0x78] sm:$0xff]
          %1132 = vset.pattern.permute.xlu0 0
          %1133 = vperm.xlu0 %1132, %v1115
          %v1134 = vpop.permute.xlu0 %1133
          %1137 = vset.pattern.permute.xlu0 0
          %1138 = vperm.xlu0 %1137, %v1116
          %v1139 = vpop.permute.xlu0 %1138
          %1142 = vset.pattern.permute.xlu0 0
          %1143 = vperm.xlu0 %1142, %v1117
          %v1144 = vpop.permute.xlu0 %1143
          %1147 = vset.pattern.permute.xlu0 0
          %1148 = vperm.xlu0 %1147, %v1118
          %v1149 = vpop.permute.xlu0 %1148
          %1152 = vset.pattern.permute.xlu0 0
          %1153 = vperm.xlu0 %1152, %v1119
          %v1154 = vpop.permute.xlu0 %1153
          %1157 = vset.pattern.permute.xlu0 0
          %1158 = vperm.xlu0 %1157, %v1120
          %v1159 = vpop.permute.xlu0 %1158
          %1162 = vset.pattern.permute.xlu0 0
          %1163 = vperm.xlu0 %1162, %v1121
          %v1164 = vpop.permute.xlu0 %1163
          %1167 = vset.pattern.permute.xlu0 0
          %1168 = vperm.xlu0 %1167, %v1122
          %v1169 = vpop.permute.xlu0 %1168
          %1172 = vset.pattern.permute.xlu0 0
          %1173 = vperm.xlu0 %1172, %v1123
          %v1174 = vpop.permute.xlu0 %1173
          %1177 = vset.pattern.permute.xlu0 0
          %1178 = vperm.xlu0 %1177, %v1124
          %v1179 = vpop.permute.xlu0 %1178
          %1182 = vset.pattern.permute.xlu0 0
          %1183 = vperm.xlu0 %1182, %v1125
          %v1184 = vpop.permute.xlu0 %1183
          %1187 = vset.pattern.permute.xlu0 0
          %1188 = vperm.xlu0 %1187, %v1126
          %v1189 = vpop.permute.xlu0 %1188
          %1192 = vset.pattern.permute.xlu0 0
          %1193 = vperm.xlu0 %1192, %v1127
          %v1194 = vpop.permute.xlu0 %1193
          %1197 = vset.pattern.permute.xlu0 0
          %1198 = vperm.xlu0 %1197, %v1128
          %v1199 = vpop.permute.xlu0 %1198
          %1202 = vset.pattern.permute.xlu0 0
          %1203 = vperm.xlu0 %1202, %v1129
          %v1204 = vpop.permute.xlu0 %1203
          %1207 = vset.pattern.permute.xlu0 0
          %1208 = vperm.xlu0 %1207, %v1130
          %v1209 = vpop.permute.xlu0 %1208
          %v1211 = vmul.f32 %v1052, %v1134
          %v1212 = vmul.f32 %v1054, %v1139
          %v1213 = vmul.f32 %v1056, %v1144
          %v1214 = vmul.f32 %v1058, %v1149
          %v1215 = vmul.f32 %v1060, %v1154
          %v1216 = vmul.f32 %v1062, %v1159
          %v1217 = vmul.f32 %v1064, %v1164
          %v1218 = vmul.f32 %v1066, %v1169
          %v1219 = vmul.f32 %v1068, %v1174
          %v1220 = vmul.f32 %v1070, %v1179
          %v1221 = vmul.f32 %v1072, %v1184
          %v1222 = vmul.f32 %v1074, %v1189
          %v1223 = vmul.f32 %v1076, %v1194
          %v1224 = vmul.f32 %v1078, %v1199
          %v1225 = vmul.f32 %v1080, %v1204
          %v1226 = vmul.f32 %v1082, %v1209
          %1227 = vst [vmem:[#allocation2 + $0x8] sm:$0xff] %v1211
          %1228 = vst [vmem:[#allocation2 + $0x18] sm:$0xff] %v1212
          %1229 = vst [vmem:[#allocation2 + $0x28] sm:$0xff] %v1213
          %1230 = vst [vmem:[#allocation2 + $0x38] sm:$0xff] %v1214
          %1231 = vst [vmem:[#allocation2 + $0x48] sm:$0xff] %v1215
          %1232 = vst [vmem:[#allocation2 + $0x58] sm:$0xff] %v1216
          %1233 = vst [vmem:[#allocation2 + $0x68] sm:$0xff] %v1217
          %1234 = vst [vmem:[#allocation2 + $0x78] sm:$0xff] %v1218
          %1235 = vst [vmem:[#allocation2 + $0x88] sm:$0xff] %v1219
          %1236 = vst [vmem:[#allocation2 + $0x98] sm:$0xff] %v1220
          %1237 = vst [vmem:[#allocation2 + $0xa8] sm:$0xff] %v1221
          %1238 = vst [vmem:[#allocation2 + $0xb8] sm:$0xff] %v1222
          %1239 = vst [vmem:[#allocation2 + $0xc8] sm:$0xff] %v1223
          %1240 = vst [vmem:[#allocation2 + $0xd8] sm:$0xff] %v1224
          %1241 = vst [vmem:[#allocation2 + $0xe8] sm:$0xff] %v1225
          %1242 = vst [vmem:[#allocation2 + $0xf8] sm:$0xff] %v1226
        $region68: #{tpu_custom_call.1} parent=51 // pred_fallthru
          _
        %s1243 = smul.u32 %s33, 128
        %s1244 = sshra.s32 %s1243, 3
        %s1245 = sand.u32 %s1243, 7
        %s1246 = smul.u32 %s1244, 2
        %s1247 = smul.addr %s1246, 8
        %s1248 = scalar_lea.vmem [#allocation2], %s1247
        %v1249 = vld [vmem:[%s1248] sm:$0xff]
        %v1250 = vld [vmem:[%s1248 + $0x10] sm:$0xff]
        %v1251 = vld [vmem:[%s1248 + $0x20] sm:$0xff]
        %v1252 = vld [vmem:[%s1248 + $0x30] sm:$0xff]
        %v1253 = vld [vmem:[%s1248 + $0x40] sm:$0xff]
        %v1254 = vld [vmem:[%s1248 + $0x50] sm:$0xff]
        %v1255 = vld [vmem:[%s1248 + $0x60] sm:$0xff]
        %v1256 = vld [vmem:[%s1248 + $0x70] sm:$0xff]
        %v1257 = vld [vmem:[%s1248 + $0x80] sm:$0xff]
        %v1258 = vld [vmem:[%s1248 + $0x90] sm:$0xff]
        %v1259 = vld [vmem:[%s1248 + $0xa0] sm:$0xff]
        %v1260 = vld [vmem:[%s1248 + $0xb0] sm:$0xff]
        %v1261 = vld [vmem:[%s1248 + $0xc0] sm:$0xff]
        %v1262 = vld [vmem:[%s1248 + $0xd0] sm:$0xff]
        %v1263 = vld [vmem:[%s1248 + $0xe0] sm:$0xff]
        %v1264 = vld [vmem:[%s1248 + $0xf0] sm:$0xff]
        %v1265 = vld [vmem:[#allocation2 + $0x8] sm:$0xff]
        %v1266 = vld [vmem:[#allocation2 + $0x18] sm:$0xff]
        %v1267 = vld [vmem:[#allocation2 + $0x28] sm:$0xff]
        %v1268 = vld [vmem:[#allocation2 + $0x38] sm:$0xff]
        %v1269 = vld [vmem:[#allocation2 + $0x48] sm:$0xff]
        %v1270 = vld [vmem:[#allocation2 + $0x58] sm:$0xff]
        %v1271 = vld [vmem:[#allocation2 + $0x68] sm:$0xff]
        %v1272 = vld [vmem:[#allocation2 + $0x78] sm:$0xff]
        %v1273 = vld [vmem:[#allocation2 + $0x88] sm:$0xff]
        %v1274 = vld [vmem:[#allocation2 + $0x98] sm:$0xff]
        %v1275 = vld [vmem:[#allocation2 + $0xa8] sm:$0xff]
        %v1276 = vld [vmem:[#allocation2 + $0xb8] sm:$0xff]
        %v1277 = vld [vmem:[#allocation2 + $0xc8] sm:$0xff]
        %v1278 = vld [vmem:[#allocation2 + $0xd8] sm:$0xff]
        %v1279 = vld [vmem:[#allocation2 + $0xe8] sm:$0xff]
        %v1280 = vld [vmem:[#allocation2 + $0xf8] sm:$0xff]
        %1281 = vmatprep.subr.mxu0 0.0
        %1282 = vmatpush1.xpose.msra.mxu0 %v1265
        %1283 = vmatprep.subr.mxu0 0.0
        %1284 = vmatpush1.xpose.msra.mxu0 %v1266
        %1285 = vmatprep.subr.mxu0 0.0
        %1286 = vmatpush1.xpose.msra.mxu0 %v1267
        %1287 = vmatprep.subr.mxu0 0.0
        %1288 = vmatpush1.xpose.msra.mxu0 %v1268
        %1289 = vmatprep.subr.mxu0 0.0
        %1290 = vmatpush1.xpose.msra.mxu0 %v1269
        %1291 = vmatprep.subr.mxu0 0.0
        %1292 = vmatpush1.xpose.msra.mxu0 %v1270
        %1293 = vmatprep.subr.mxu0 0.0
        %1294 = vmatpush1.xpose.msra.mxu0 %v1271
        %1295 = vmatprep.subr.mxu0 0.0
        %1296 = vmatpush1.xpose.msra.mxu0 %v1272
        %1297 = vmatprep.subr.mxu0 0.0
        %1298 = vmatpush1.xpose.msra.mxu0 %v1273
        %1299 = vmatprep.subr.mxu0 0.0
        %1300 = vmatpush1.xpose.msra.mxu0 %v1274
        %1301 = vmatprep.subr.mxu0 0.0
        %1302 = vmatpush1.xpose.msra.mxu0 %v1275
        %1303 = vmatprep.subr.mxu0 0.0
        %1304 = vmatpush1.xpose.msra.mxu0 %v1276
        %1305 = vmatprep.subr.mxu0 0.0
        %1306 = vmatpush1.xpose.msra.mxu0 %v1277
        %1307 = vmatprep.subr.mxu0 0.0
        %1308 = vmatpush1.xpose.msra.mxu0 %v1278
        %1309 = vmatprep.subr.mxu0 0.0
        %1310 = vmatpush1.xpose.msra.mxu0 %v1279
        %1311 = vmatprep.subr.mxu0 0.0
        %1312 = vmatpush1.xpose.msra.mxu0 %v1280
        %1313 = vmatprep.subr.mxu0 0.0
        %1314 = vmatpush1.xpose.msra.mxu0 0.0
        %1315 = vmatprep.subr.mxu0 0.0
        %1316 = vmatpush1.xpose.msra.mxu0 0.0
        %1317 = vmatprep.subr.mxu0 0.0
        %1318 = vmatpush1.xpose.msra.mxu0 0.0
        %1319 = vmatprep.subr.mxu0 0.0
        %1320 = vmatpush1.xpose.msra.mxu0 0.0
        %1321 = vmatprep.subr.mxu0 0.0
        %1322 = vmatpush1.xpose.msra.mxu0 0.0
        %1323 = vmatprep.subr.mxu0 0.0
        %1324 = vmatpush1.xpose.msra.mxu0 0.0
        %1325 = vmatprep.subr.mxu0 0.0
        %1326 = vmatpush1.xpose.msra.mxu0 0.0
        %1327 = vmatprep.subr.mxu0 0.0
        %1328 = vmatpush1.xpose.msra.mxu0 0.0
        %1329 = vmatprep.subr.mxu0 0.0
        %1330 = vmatpush1.xpose.msra.mxu0 0.0
        %1331 = vmatprep.subr.mxu0 0.0
        %1332 = vmatpush1.xpose.msra.mxu0 0.0
        %1333 = vmatprep.subr.mxu0 0.0
        %1334 = vmatpush1.xpose.msra.mxu0 0.0
        %1335 = vmatprep.subr.mxu0 0.0
        %1336 = vmatpush1.xpose.msra.mxu0 0.0
        %1337 = vmatprep.subr.mxu0 0.0
        %1338 = vmatpush1.xpose.msra.mxu0 0.0
        %1339 = vmatprep.subr.mxu0 0.0
        %1340 = vmatpush1.xpose.msra.mxu0 0.0
        %1341 = vmatprep.subr.mxu0 0.0
        %1342 = vmatpush1.xpose.msra.mxu0 0.0
        %1343 = vmatprep.subr.mxu0 0.0
        %1344 = vmatpush1.xpose.msra.mxu0 0.0
        %1345 = vmatprep.mubr.f32.mxu0 0.0
        %1346 = vmatmul.mubr.f32.gmra.mrb[0].mxu0 %v1249
        %v1347 = vpop.f32.mrb[0].mxu0
        %v1348 = vadd.f32 0.0, %v1347
        %v1349 = vpop.f32.mrb[0].mxu0
        %1350 = vmatprep.mubr.f32.mxu0 0.0
        %1351 = vmatmul.mubr.f32.gmra.mrb[0].mxu0 %v1250
        %v1352 = vpop.f32.mrb[0].mxu0
        %v1353 = vadd.f32 0.0, %v1352
        %v1354 = vpop.f32.mrb[0].mxu0
        %1355 = vmatprep.mubr.f32.mxu0 0.0
        %1356 = vmatmul.mubr.f32.gmra.mrb[0].mxu0 %v1251
        %v1357 = vpop.f32.mrb[0].mxu0
        %v1358 = vadd.f32 0.0, %v1357
        %v1359 = vpop.f32.mrb[0].mxu0
        %1360 = vmatprep.mubr.f32.mxu0 0.0
        %1361 = vmatmul.mubr.f32.gmra.mrb[0].mxu0 %v1252
        %v1362 = vpop.f32.mrb[0].mxu0
        %v1363 = vadd.f32 0.0, %v1362
        %v1364 = vpop.f32.mrb[0].mxu0
        %1365 = vmatprep.mubr.f32.mxu0 0.0
        %1366 = vmatmul.mubr.f32.gmra.mrb[0].mxu0 %v1253
        %v1367 = vpop.f32.mrb[0].mxu0
        %v1368 = vadd.f32 0.0, %v1367
        %v1369 = vpop.f32.mrb[0].mxu0
        %1370 = vmatprep.mubr.f32.mxu0 0.0
        %1371 = vmatmul.mubr.f32.gmra.mrb[0].mxu0 %v1254
        %v1372 = vpop.f32.mrb[0].mxu0
        %v1373 = vadd.f32 0.0, %v1372
        %v1374 = vpop.f32.mrb[0].mxu0
        %1375 = vmatprep.mubr.f32.mxu0 0.0
        %1376 = vmatmul.mubr.f32.gmra.mrb[0].mxu0 %v1255
        %v1377 = vpop.f32.mrb[0].mxu0
        %v1378 = vadd.f32 0.0, %v1377
        %v1379 = vpop.f32.mrb[0].mxu0
        %1380 = vmatprep.mubr.f32.mxu0 0.0
        %1381 = vmatmul.mubr.f32.gmra.mrb[0].mxu0 %v1256
        %v1382 = vpop.f32.mrb[0].mxu0
        %v1383 = vadd.f32 0.0, %v1382
        %v1384 = vpop.f32.mrb[0].mxu0
        %1385 = vmatprep.mubr.f32.mxu0 0.0
        %1386 = vmatmul.mubr.f32.gmra.mrb[0].mxu0 %v1257
        %v1387 = vpop.f32.mrb[0].mxu0
        %v1388 = vadd.f32 0.0, %v1387
        %v1389 = vpop.f32.mrb[0].mxu0
        %1390 = vmatprep.mubr.f32.mxu0 0.0
        %1391 = vmatmul.mubr.f32.gmra.mrb[0].mxu0 %v1258
        %v1392 = vpop.f32.mrb[0].mxu0
        %v1393 = vadd.f32 0.0, %v1392
        %v1394 = vpop.f32.mrb[0].mxu0
        %1395 = vmatprep.mubr.f32.mxu0 0.0
        %1396 = vmatmul.mubr.f32.gmra.mrb[0].mxu0 %v1259
        %v1397 = vpop.f32.mrb[0].mxu0
        %v1398 = vadd.f32 0.0, %v1397
        %v1399 = vpop.f32.mrb[0].mxu0
        %1400 = vmatprep.mubr.f32.mxu0 0.0
        %1401 = vmatmul.mubr.f32.gmra.mrb[0].mxu0 %v1260
        %v1402 = vpop.f32.mrb[0].mxu0
        %v1403 = vadd.f32 0.0, %v1402
        %v1404 = vpop.f32.mrb[0].mxu0
        %1405 = vmatprep.mubr.f32.mxu0 0.0
        %1406 = vmatmul.mubr.f32.gmra.mrb[0].mxu0 %v1261
        %v1407 = vpop.f32.mrb[0].mxu0
        %v1408 = vadd.f32 0.0, %v1407
        %v1409 = vpop.f32.mrb[0].mxu0
        %1410 = vmatprep.mubr.f32.mxu0 0.0
        %1411 = vmatmul.mubr.f32.gmra.mrb[0].mxu0 %v1262
        %v1412 = vpop.f32.mrb[0].mxu0
        %v1413 = vadd.f32 0.0, %v1412
        %v1414 = vpop.f32.mrb[0].mxu0
        %1415 = vmatprep.mubr.f32.mxu0 0.0
        %1416 = vmatmul.mubr.f32.gmra.mrb[0].mxu0 %v1263
        %v1417 = vpop.f32.mrb[0].mxu0
        %v1418 = vadd.f32 0.0, %v1417
        %v1419 = vpop.f32.mrb[0].mxu0
        %1420 = vmatprep.mubr.f32.mxu0 0.0
        %1421 = vmatmul.mubr.f32.gmra.mrb[0].mxu0 %v1264
        %v1422 = vpop.f32.mrb[0].mxu0
        %v1423 = vadd.f32 0.0, %v1422
        %v1424 = vpop.f32.mrb[0].mxu0
        %1425 = vdwg.mxu0
        %v1426 = vlaneseq
        %v1427 = vshrl.u32 %v1426, 7
        %v1428 = vadd.s32 %v1427, 8
        %v1429 = vadd.s32 %v1427, 16
        %v1430 = vadd.s32 %v1427, 24
        %v1431 = vadd.s32 %v1427, 32
        %v1432 = vadd.s32 %v1427, 40
        %v1433 = vadd.s32 %v1427, 48
        %v1434 = vadd.s32 %v1427, 56
        %v1435 = vadd.s32 %v1427, 64
        %v1436 = vadd.s32 %v1427, 72
        %v1437 = vadd.s32 %v1427, 80
        %v1438 = vadd.s32 %v1427, 88
        %v1439 = vadd.s32 %v1427, 96
        %v1440 = vadd.s32 %v1427, 104
        %v1441 = vadd.s32 %v1427, 112
        %v1442 = vadd.s32 %v1427, 120
        %v1443 = vstv %s1243
        %v1444 = vadd.s32 %v1443, %v1427
        %v1445 = vadd.s32 %v1443, %v1428
        %v1446 = vadd.s32 %v1443, %v1429
        %v1447 = vadd.s32 %v1443, %v1430
        %v1448 = vadd.s32 %v1443, %v1431
        %v1449 = vadd.s32 %v1443, %v1432
        %v1450 = vadd.s32 %v1443, %v1433
        %v1451 = vadd.s32 %v1443, %v1434
        %v1452 = vadd.s32 %v1443, %v1435
        %v1453 = vadd.s32 %v1443, %v1436
        %v1454 = vadd.s32 %v1443, %v1437
        %v1455 = vadd.s32 %v1443, %v1438
        %v1456 = vadd.s32 %v1443, %v1439
        %v1457 = vadd.s32 %v1443, %v1440
        %v1458 = vadd.s32 %v1443, %v1441
        %v1459 = vadd.s32 %v1443, %v1442
        %v1460 = vlaneseq
        %v1461 = vand.u32 %v1460, 127
        %vm1462 = vcmp.gt.s32.totalorder %v1444, %v1461
        %vm1463 = vcmp.gt.s32.totalorder %v1445, %v1461
        %vm1464 = vcmp.gt.s32.totalorder %v1446, %v1461
        %vm1465 = vcmp.gt.s32.totalorder %v1447, %v1461
        %vm1466 = vcmp.gt.s32.totalorder %v1448, %v1461
        %vm1467 = vcmp.gt.s32.totalorder %v1449, %v1461
        %vm1468 = vcmp.gt.s32.totalorder %v1450, %v1461
        %vm1469 = vcmp.gt.s32.totalorder %v1451, %v1461
        %vm1470 = vcmp.gt.s32.totalorder %v1452, %v1461
        %vm1471 = vcmp.gt.s32.totalorder %v1453, %v1461
        %vm1472 = vcmp.gt.s32.totalorder %v1454, %v1461
        %vm1473 = vcmp.gt.s32.totalorder %v1455, %v1461
        %vm1474 = vcmp.gt.s32.totalorder %v1456, %v1461
        %vm1475 = vcmp.gt.s32.totalorder %v1457, %v1461
        %vm1476 = vcmp.gt.s32.totalorder %v1458, %v1461
        %vm1477 = vcmp.gt.s32.totalorder %v1459, %v1461
        %v1478 = vsel %vm1462, 2.5e+11, 0.0
        %v1479 = vsel %vm1463, 2.5e+11, 0.0
        %v1480 = vsel %vm1464, 2.5e+11, 0.0
        %v1481 = vsel %vm1465, 2.5e+11, 0.0
        %v1482 = vsel %vm1466, 2.5e+11, 0.0
        %v1483 = vsel %vm1467, 2.5e+11, 0.0
        %v1484 = vsel %vm1468, 2.5e+11, 0.0
        %v1485 = vsel %vm1469, 2.5e+11, 0.0
        %v1486 = vsel %vm1470, 2.5e+11, 0.0
        %v1487 = vsel %vm1471, 2.5e+11, 0.0
        %v1488 = vsel %vm1472, 2.5e+11, 0.0
        %v1489 = vsel %vm1473, 2.5e+11, 0.0
        %v1490 = vsel %vm1474, 2.5e+11, 0.0
        %v1491 = vsel %vm1475, 2.5e+11, 0.0
        %v1492 = vsel %vm1476, 2.5e+11, 0.0
        %v1493 = vsel %vm1477, 2.5e+11, 0.0
        %v1494 = vsub.f32 %v1348, %v1478
        %v1495 = vsub.f32 %v1353, %v1479
        %v1496 = vsub.f32 %v1358, %v1480
        %v1497 = vsub.f32 %v1363, %v1481
        %v1498 = vsub.f32 %v1368, %v1482
        %v1499 = vsub.f32 %v1373, %v1483
        %v1500 = vsub.f32 %v1378, %v1484
        %v1501 = vsub.f32 %v1383, %v1485
        %v1502 = vsub.f32 %v1388, %v1486
        %v1503 = vsub.f32 %v1393, %v1487
        %v1504 = vsub.f32 %v1398, %v1488
        %v1505 = vsub.f32 %v1403, %v1489
        %v1506 = vsub.f32 %v1408, %v1490
        %v1507 = vsub.f32 %v1413, %v1491
        %v1508 = vsub.f32 %v1418, %v1492
        %v1509 = vsub.f32 %v1423, %v1493
        %v1510 = vld [vmem:[%s446] sm:$0x1]
        %v1512 = vlaneseq
        %v1513 = vshrl.u32 %v1512, 7
        %v1514 = vsub.s32 0, %v1513
        %v1515 = vrot.slane %v1510, %v1514
        %v1517 = vsub.f32 %v1494, %v1515
        %v1518 = vsub.f32 %v1495, %v1515
        %v1519 = vsub.f32 %v1496, %v1515
        %v1520 = vsub.f32 %v1497, %v1515
        %v1521 = vsub.f32 %v1498, %v1515
        %v1522 = vsub.f32 %v1499, %v1515
        %v1523 = vsub.f32 %v1500, %v1515
        %v1524 = vsub.f32 %v1501, %v1515
        %v1525 = vsub.f32 %v1502, %v1515
        %v1526 = vsub.f32 %v1503, %v1515
        %v1527 = vsub.f32 %v1504, %v1515
        %v1528 = vsub.f32 %v1505, %v1515
        %v1529 = vsub.f32 %v1506, %v1515
        %v1530 = vsub.f32 %v1507, %v1515
        %v1531 = vsub.f32 %v1508, %v1515
        %v1532 = vsub.f32 %v1509, %v1515
        %1533 = vst [vmem:[%s429] sm:$0xff] %v1517
        %1534 = vst [vmem:[%s429 + $0x8] sm:$0xff] %v1518
        %1535 = vst [vmem:[%s429 + $0x10] sm:$0xff] %v1519
        %1536 = vst [vmem:[%s429 + $0x18] sm:$0xff] %v1520
        %1537 = vst [vmem:[%s429 + $0x20] sm:$0xff] %v1521
        %1538 = vst [vmem:[%s429 + $0x28] sm:$0xff] %v1522
        %1539 = vst [vmem:[%s429 + $0x30] sm:$0xff] %v1523
        %1540 = vst [vmem:[%s429 + $0x38] sm:$0xff] %v1524
        %1541 = vst [vmem:[%s429 + $0x40] sm:$0xff] %v1525
        %1542 = vst [vmem:[%s429 + $0x48] sm:$0xff] %v1526
        %1543 = vst [vmem:[%s429 + $0x50] sm:$0xff] %v1527
        %1544 = vst [vmem:[%s429 + $0x58] sm:$0xff] %v1528
        %1545 = vst [vmem:[%s429 + $0x60] sm:$0xff] %v1529
        %1546 = vst [vmem:[%s429 + $0x68] sm:$0xff] %v1530
        %1547 = vst [vmem:[%s429 + $0x70] sm:$0xff] %v1531
        %1548 = vst [vmem:[%s429 + $0x78] sm:$0xff] %v1532
        %s1549 = sand.u32 %s250, 1
        %s1550 = scalar_lea.sflag [#allocation5], %s1549
        %s1551 = sand.u32 %s250, 1
        %s1552 = smul.addr %s1551, 128
        %s1553 = scalar_lea.vmem [#allocation9], %s1552
        // Predicated region
        $region69: #{tpu_custom_call.1} parent=51 // pred_check
          %p1554 = pneg %p260
        $region70: #{tpu_custom_call.1} parent=51 // pred_check_branch
          %1556 = sbr.rel (%p1554) target = $region72
        $region71: #{tpu_custom_call.1} parent=51 // pred_region
          %s1557 = smul.u32 16, %s33
          %s1559 = ssub.s32 2048, 2048
          %1560 = vsyncadd %s1550, %s1559
          %s1561 = smul.addr %s32, 16
          %s1562 = sadd.s32 %s1557, %s1561
          %s1563 = smul.addr %s31, 64
          %s1564 = sadd.s32 %s1562, %s1563
          %s1565 = smul.addr %s1564, 128
          %s1566 = scalar_lea.hbm %s8, %s1565
          %s1567 = sshll.u32 %s1553, 4
          %s1568 = int_to_ptr.vmem [resolvable:$true] %s1567
          %1573 = dma.vmem_to_hbm [thread:$0]  %s1568, 2048, %s1566, %s1550, 128, 128, 8
        $region72: #{tpu_custom_call.1} parent=51 // pred_fallthru
          _
      $region52: #{tpu_custom_call.1} parent=5 // pred_fallthru
        _
      %p1574 = scmp.le.s32.totalorder 2, %s21
      // Predicated region
      $region73: #{tpu_custom_call.1} parent=5 // pred_check
        %p1575 = pneg %p1574
      $region74: #{tpu_custom_call.1} parent=5 // pred_check_branch
        %1577 = sbr.rel (%p1575) target = $region76
      $region75: #{tpu_custom_call.1} parent=5 // pred_region
        %s1578 = ssub.s32 %s21, 2
        // Predicated region
        $region77: #{tpu_custom_call.1} parent=75 // pred_check
          %p1579 = pneg %p266
        $region78: #{tpu_custom_call.1} parent=75 // pred_check_branch
          %1581 = sbr.rel (%p1579) target = $region80
        $region79: #{tpu_custom_call.1} parent=75 // pred_region
          %s1582 = sand.u32 %s251, 1
          %s1583 = scalar_lea.sflag [#allocation5], %s1582
          %s1584 = sand.u32 %s251, 1
          %s1585 = smul.addr %s1584, 128
          %s1586 = scalar_lea.vmem [#allocation9], %s1585
          %1587 = dma.done %s1583, 2048
        $region80: #{tpu_custom_call.1} parent=75 // pred_fallthru
          _
      $region76: #{tpu_custom_call.1} parent=5 // pred_fallthru
        _
    $region6: #{tpu_custom_call.1} parent=1 // loop_footer
      %s25 = sadd.s32 1, %s21
    $region7: #{tpu_custom_call.1} parent=1 // loop_footer_branch
      %20 = sbr.rel target = $region3
    $region8: #{tpu_custom_call.1} parent=1 // loop_exit
      _
    %1588 = vsyncpa [#allocation4], 1
    %s1589 = scalar_lea.sflag [#allocation4], 1
    %1590 = vsyncpa %s1589, 1
    %1591 = vsyncpa [#allocation7], 1
    %1592 = vsyncpa [#allocation5], 1
    %s1593 = scalar_lea.sflag [#allocation5], 1
    %1594 = vsyncpa %s1593, 1

</llo_original>
